<compile_context>
chip_gen: v7x
topology: tpu7x:2x2x1
jax: 0.10.0
libtpu: 0.0.40
codegen_flags: <defaults>
</compile_context>

<pallas_src>
import numpy as np

import jax
import jax.numpy as jnp
from jax import lax
from jax.experimental import pallas as pl
from jax.experimental.pallas import tpu as pltpu


def _round_up(x, m):
    return ((x + m - 1) // m) * m


def _pick_images_per_step(n, oh):
    """Largest divisor d of n with d*oh <= 256 rows (one MXU pass); prefer an
    even grid extent (v7x has 2 TensorCores) when that still keeps >=128 rows."""
    divs = [d for d in range(1, n + 1) if n % d == 0]
    fits = [d for d in divs if d * oh <= 256] or [1]
    best = max(fits)
    even = [d for d in fits if (n // d) % 2 == 0 and d * oh >= 128]
    if even:
        best = max(even)
    return best


def _make_down_block_kernel(K, NR, OWCP, norm, pool, eps, neg_slope, inv_area):
    """Kernel body.  Per grid step (= `d` images), the Refs are:

      x_ref   : (1, d*H, W*C_in)     d images stacked along rows
      w_ref   : (K, W*C_in, OWCP)    banded conv weights (one band per ky)
      aux_ref : (3, OWCP)            rows: bias_flat, gamma_flat, beta_flat
      s_ref   : (OWCP, C_out)        0/1 channel-sum matrix           (norm only)
      st_ref  : (C_out, OWCP)        0/1 channel-broadcast matrix     (norm only)
      r_ref   : (d, NR)              0/1 per-image valid-row selector (norm only)
      rt_ref  : (NR, d)              its transpose                    (norm only)
      p_ref   : (RO, NR)             0/1 row pool / row compaction
      q_ref   : (OWCP, PWCP)         0/1 column pool                  (pool only)
      o_ref   : (1, RO, OUTC)        lane-dense output slab
    """

    def kernel(*refs):
        it = iter(refs)
        x_ref = next(it)
        w_ref = next(it)
        aux_ref = next(it)
        if norm:
            s_ref, st_ref, r_ref, rt_ref = next(it), next(it), next(it), next(it)
        p_ref = next(it)
        q_ref = next(it) if pool else None
        o_ref = next(it)

        # ---- valid conv, stride 1: K accumulated MXU matmuls vs banded weights.
        # Rows at image seams (h >= OH within an image) are garbage; they are
        # never selected by R / P below.
        y = jnp.dot(x_ref[0, 0:NR, :], w_ref[0],
                    preferred_element_type=jnp.float32)              # (NR, OWCP)
        for ky in range(1, K):
            y = y + jnp.dot(x_ref[0, ky:ky + NR, :], w_ref[ky],
                            preferred_element_type=jnp.float32)
        y = y + aux_ref[0:1, :]                                      # conv bias

        # ---- InstanceNorm2d(affine): per-image stats via 0/1 selection matmuls.
        if norm:
            # one MXU push for both sum and sum-of-squares: stack along lanes.
            z = jnp.concatenate([y, y * y], axis=1)                  # (NR, 2*OWCP)
            rz = jnp.dot(r_ref[...], z,
                         preferred_element_type=jnp.float32)         # (d, 2*OWCP)
            s_mat = s_ref[...]
            sum_c = jnp.dot(rz[:, :OWCP], s_mat,
                            preferred_element_type=jnp.float32)      # (d, C_out)
            sumsq_c = jnp.dot(rz[:, OWCP:], s_mat,
                              preferred_element_type=jnp.float32)    # (d, C_out)
            mean_c = sum_c * inv_area
            var_c = jnp.maximum(sumsq_c * inv_area - mean_c * mean_c, 0.0)
            inv_c = lax.rsqrt(var_c + eps)
            st_mat = st_ref[...]
            rt = rt_ref[...]
            mean_f = jnp.dot(rt, jnp.dot(mean_c, st_mat,
                                         preferred_element_type=jnp.float32),
                             preferred_element_type=jnp.float32)     # (NR, OWCP)
            inv_f = jnp.dot(rt, jnp.dot(inv_c, st_mat,
                                        preferred_element_type=jnp.float32),
                            preferred_element_type=jnp.float32)      # (NR, OWCP)
            y = (y - mean_f) * (inv_f * aux_ref[1:2, :]) + aux_ref[2:3, :]

        # ---- leaky_relu(0.2)
        y = jnp.where(y >= 0, y, neg_slope * y)

        # ---- AvgPool2d(2) (floor mode) as two 0/1 matmuls; for pool=False the
        # row matmul just compacts the valid rows.  ONE lane-dense store.
        yr = jnp.dot(p_ref[...], y, preferred_element_type=jnp.float32)   # (RO, OWCP)
        if pool:
            yr = 0.25 * jnp.dot(yr, q_ref[...],
                                preferred_element_type=jnp.float32)       # (RO, PWCP)
        o_ref[0] = yr.astype(o_ref.dtype)

    return kernel


def down_block2d(x_nchw, w_oihw, bias, gamma=None, beta=None, *, norm=True,
                 pool=True, eps=1e-5, neg_slope=0.2, images_per_step=None,
                 mxu_dtype=jnp.float32, out_dtype=jnp.float32):
    """Pallas implementation of DownBlock2d.forward (PyTorch NCHW/OIHW layout)."""
    N, C_in, H, W = x_nchw.shape
    C_out, C_in_w, K, K2 = w_oihw.shape
    assert C_in_w == C_in and K == K2
    OH, OW = H - K + 1, W - K + 1
    PH, PW = (OH // 2, OW // 2) if pool else (OH, OW)
    WC = W * C_in
    OWC, PWC = OW * C_out, PW * C_out
    OWCP = _round_up(OWC, 128)          # lane-dense conv / norm layout
    PWCP = _round_up(PWC, 128)          # lane-dense output layout
    OUTC = PWCP if pool else OWCP
    f32 = jnp.float32
    sel_dtype = jnp.bfloat16            # 0/1 matrices are exact in bf16

    d = images_per_step or _pick_images_per_step(N, OH)
    assert N % d == 0, (N, d)
    G = N // d                          # grid extent
    dH = d * H
    NR = dH - K + 1                     # conv rows per step (incl. seam garbage)
    RO = d * PH                         # compacted output rows per step

    # ---------------- wrapper-side layout / weight plumbing ----------------
    # Input: NCHW -> (G, d*H, W*C_in), last dim ordered (w, ci).
    x_flat = (jnp.transpose(x_nchw, (0, 2, 3, 1))
              .reshape(G, dH, WC).astype(mxu_dtype))

    # Banded conv weight: B[ky, w*C_in+ci, ow*C_out+co] = w[co,ci,ky,w-ow] if 0<=w-ow<K.
    w_t = jnp.transpose(w_oihw, (2, 3, 1, 0)).astype(f32)      # (ky, kx, ci, co)
    B = jnp.zeros((K, W, C_in, OW, C_out), f32)
    for ow in range(OW):
        B = B.at[:, ow:ow + K, :, ow, :].set(w_t)
    B = B.reshape(K, WC, OWC)
    B = jnp.pad(B, ((0, 0), (0, 0), (0, OWCP - OWC))).astype(mxu_dtype)

    # Packed per-channel constants, pre-tiled to the flat (ow, co) lane layout.
    g = gamma if gamma is not None else jnp.ones((C_out,), f32)
    bt = beta if beta is not None else jnp.zeros((C_out,), f32)
    aux = jnp.stack([jnp.tile(bias.astype(f32), OW),
                     jnp.tile(g.astype(f32), OW),
                     jnp.tile(bt.astype(f32), OW)], axis=0)
    aux = jnp.pad(aux, ((0, 0), (0, OWCP - OWC)))              # (3, OWCP)

    args = [x_flat, B, aux]
    in_specs = [
        pl.BlockSpec((1, dH, WC), lambda n: (n, 0, 0)),
        pl.BlockSpec((K, WC, OWCP), lambda n: (0, 0, 0)),
        pl.BlockSpec((3, OWCP), lambda n: (0, 0)),
    ]

    if norm:
        S = np.zeros((OWCP, C_out), np.float32)                # channel-sum
        S[:OWC, :] = np.tile(np.eye(C_out, dtype=np.float32), (OW, 1))
        R = np.zeros((d, NR), np.float32)                      # per-image valid rows
        for b in range(d):
            R[b, b * H: b * H + OH] = 1.0
        args += [jnp.asarray(S, sel_dtype), jnp.asarray(S.T, sel_dtype),
                 jnp.asarray(R, sel_dtype), jnp.asarray(R.T, sel_dtype)]
        in_specs += [pl.BlockSpec((OWCP, C_out), lambda n: (0, 0)),
                     pl.BlockSpec((C_out, OWCP), lambda n: (0, 0)),
                     pl.BlockSpec((d, NR), lambda n: (0, 0)),
                     pl.BlockSpec((NR, d), lambda n: (0, 0))]

    # Row pooling / row compaction matrix (always present).
    P = np.zeros((RO, NR), np.float32)
    if pool:
        for b in range(d):
            for i in range(PH):
                P[b * PH + i, b * H + 2 * i] = 1.0
                P[b * PH + i, b * H + 2 * i + 1] = 1.0
    else:
        for b in range(d):
            P[b * OH: b * OH + OH, b * H: b * H + OH] = np.eye(OH, dtype=np.float32)
    args.append(jnp.asarray(P, sel_dtype))
    in_specs.append(pl.BlockSpec((RO, NR), lambda n: (0, 0)))

    if pool:
        Qs = np.zeros((OW, PW), np.float32)                    # column-pair pooler
        for pw in range(PW):
            Qs[2 * pw, pw] = 1.0
            Qs[2 * pw + 1, pw] = 1.0
        Q = np.zeros((OWCP, PWCP), np.float32)
        Q[:OWC, :PWC] = np.kron(Qs, np.eye(C_out, dtype=np.float32))
        args.append(jnp.asarray(Q, sel_dtype))
        in_specs.append(pl.BlockSpec((OWCP, PWCP), lambda n: (0, 0)))

    kernel = _make_down_block_kernel(K, NR, OWCP, norm, pool, float(eps),
                                     float(neg_slope), 1.0 / float(OH * OW))

    # ---- VMEM budget (review item 4): blocks are double-buffered by the pipeline.
    def _nbytes(shape, dtype):
        return int(np.prod(shape)) * np.dtype(dtype).itemsize

    blk_bytes = (_nbytes((dH, WC), mxu_dtype)
                 + _nbytes((K, WC, OWCP), mxu_dtype)
                 + _nbytes((3, OWCP), f32)
                 + _nbytes((RO, NR), sel_dtype)
                 + _nbytes((RO, OUTC), out_dtype))
    if norm:
        blk_bytes += 2 * _nbytes((OWCP, C_out), sel_dtype) + 2 * _nbytes((d, NR), sel_dtype)
    if pool:
        blk_bytes += _nbytes((OWCP, PWCP), sel_dtype)
    vmem_limit = int(min(max(2 * blk_bytes + (4 << 20), 16 << 20), 64 << 20))

    out_flat = pl.pallas_call(
        kernel,
        out_shape=jax.ShapeDtypeStruct((G, RO, OUTC), out_dtype),
        grid_spec=pltpu.PrefetchScalarGridSpec(
            num_scalar_prefetch=0,
            grid=(G,),
            in_specs=in_specs,
            out_specs=pl.BlockSpec((1, RO, OUTC), lambda n: (n, 0, 0)),
        ),
        compiler_params=pltpu.CompilerParams(
            dimension_semantics=("parallel",),
            vmem_limit_bytes=vmem_limit),
    )(*args)

    # Flat, padded (G, d*PH, OUTC) -> NCHW (layout plumbing only).
    out = out_flat.reshape(N, PH, OUTC)[:, :, :PWC].reshape(N, PH, PW, C_out)
    return jnp.transpose(out, (0, 3, 1, 2))


def spectral_normalize(w_oihw, n_iters=5):
    """sn=True path: spectral norm is pure weight preprocessing -> plain JAX glue."""
    C_out = w_oihw.shape[0]
    mat = w_oihw.reshape(C_out, -1)
    u = jnp.ones((C_out,), jnp.float32) / jnp.sqrt(C_out)
    v = None
    for _ in range(n_iters):
        v = mat.T @ u
        v = v / (jnp.linalg.norm(v) + 1e-12)
        u = mat @ v
        u = u / (jnp.linalg.norm(u) + 1e-12)
    sigma = u @ mat @ v
    return w_oihw / sigma


def ref_down_block2d(x, w, b, gamma, beta, norm, pool, eps=1e-5, neg=0.2):
    """Pure-JAX reference (matches the PyTorch forward semantics)."""
    y = lax.conv_general_dilated(x, w, (1, 1), 'VALID',
                                 dimension_numbers=('NCHW', 'OIHW', 'NCHW'))
    y = y + b[None, :, None, None]
    if norm:
        mean = jnp.mean(y, axis=(2, 3), keepdims=True)
        var = jnp.mean((y - mean) ** 2, axis=(2, 3), keepdims=True)
        y = (y - mean) / jnp.sqrt(var + eps)
        y = y * gamma[None, :, None, None] + beta[None, :, None, None]
    y = jnp.where(y >= 0, y, neg * y)
    if pool:
        y = lax.reduce_window(y, 0.0, lax.add, (1, 1, 2, 2), (1, 1, 2, 2), 'VALID') / 4.0
    return y


if __name__ == "__main__":
    key = jax.random.PRNGKey(0)
    k1, k2, k3, k4, k5 = jax.random.split(key, 5)

    # DownBlock2d(in_features=4, out_features=8, norm=True, kernel_size=4,
    #             pool=True, sn=False)
    N, C_in, H, W = 2, 4, 16, 16
    C_out, K = 8, 4
    norm, pool, sn = True, True, False

    x = jax.random.normal(k1, (N, C_in, H, W), jnp.float32)
    w = 0.1 * jax.random.normal(k2, (C_out, C_in, K, K), jnp.float32)
    b = 0.1 * jax.random.normal(k3, (C_out,), jnp.float32)
    gamma = 1.0 + 0.1 * jax.random.normal(k4, (C_out,), jnp.float32)
    beta = 0.1 * jax.random.normal(k5, (C_out,), jnp.float32)

    if sn:
        w = spectral_normalize(w)

    out = down_block2d(x, w, b, gamma, beta, norm=norm, pool=pool)
    out = jax.block_until_ready(out)

    ref = ref_down_block2d(x, w, b, gamma, beta, norm, pool)
    assert out.shape == ref.shape, (out.shape, ref.shape)
    err = float(jnp.max(jnp.abs(out - ref)))
    if err < 1e-3:
        print("KERNEL_OK")
    else:
        print(f"MISMATCH max_abs_err={err}")
</pallas_src>

<mosaic_0001>
module attributes {stable_mosaic.version = 11 : i64} {
  func.func @kernel(%arg0: i32, %arg1: memref<1x32x64xf32, #tpu.memory_space<vmem>>, %arg2: memref<4x64x128xf32, #tpu.memory_space<vmem>>, %arg3: memref<3x128xf32, #tpu.memory_space<vmem>>, %arg4: memref<128x8xbf16, #tpu.memory_space<vmem>>, %arg5: memref<8x128xbf16, #tpu.memory_space<vmem>>, %arg6: memref<2x29xbf16, #tpu.memory_space<vmem>>, %arg7: memref<29x2xbf16, #tpu.memory_space<vmem>>, %arg8: memref<12x29xbf16, #tpu.memory_space<vmem>>, %arg9: memref<128x128xbf16, #tpu.memory_space<vmem>>, %arg10: memref<1x12x128xf32, #tpu.memory_space<vmem>>) attributes {dimension_semantics = [#tpu.dimension_semantics<parallel>], iteration_bounds = array<i64: 1>, scalar_prefetch = 0 : i64, scratch_operands = 0 : i64, tpu.core_type = #tpu.core_type<tc>, window_params = [{transform_indices = @transform_0, window_bounds = array<i64: 1, 32, 64>}, {pipeline_mode = #tpu.pipeline_mode<synchronous>, transform_indices = @transform_1, window_bounds = array<i64: 4, 64, 128>}, {pipeline_mode = #tpu.pipeline_mode<synchronous>, transform_indices = @transform_2, window_bounds = array<i64: 3, 128>}, {pipeline_mode = #tpu.pipeline_mode<synchronous>, transform_indices = @transform_3, window_bounds = array<i64: 128, 8>}, {pipeline_mode = #tpu.pipeline_mode<synchronous>, transform_indices = @transform_4, window_bounds = array<i64: 8, 128>}, {pipeline_mode = #tpu.pipeline_mode<synchronous>, transform_indices = @transform_5, window_bounds = array<i64: 2, 29>}, {pipeline_mode = #tpu.pipeline_mode<synchronous>, transform_indices = @transform_6, window_bounds = array<i64: 29, 2>}, {pipeline_mode = #tpu.pipeline_mode<synchronous>, transform_indices = @transform_7, window_bounds = array<i64: 12, 29>}, {pipeline_mode = #tpu.pipeline_mode<synchronous>, transform_indices = @transform_8, window_bounds = array<i64: 128, 128>}, {transform_indices = @transform_9, window_bounds = array<i64: 1, 12, 128>}]} {
    %c0 = arith.constant 0 : index
    %c0_0 = arith.constant 0 : index
    %c0_1 = arith.constant 0 : index
    %0 = vector.load %arg1[%c0, %c0_0, %c0_1] : memref<1x32x64xf32, #tpu.memory_space<vmem>>, vector<1x29x64xf32>
    %1 = vector.shape_cast %0 : vector<1x29x64xf32> to vector<29x64xf32>
    %c0_2 = arith.constant 0 : index
    %c0_3 = arith.constant 0 : index
    %c0_4 = arith.constant 0 : index
    %2 = vector.load %arg2[%c0_2, %c0_3, %c0_4] : memref<4x64x128xf32, #tpu.memory_space<vmem>>, vector<1x64x128xf32>
    %3 = vector.shape_cast %2 : vector<1x64x128xf32> to vector<64x128xf32>
    %cst = arith.constant dense<0.000000e+00> : vector<29x128xf32>
    %4 = tpu.matmul %1, %3, %cst {dimension_numbers = #tpu.dot_dimension_numbers<[1], [0], [0], [1], [0, 0, 1, 1], [], []>} : vector<29x64xf32>, vector<64x128xf32>, vector<29x128xf32> -> vector<29x128xf32>
    %c0_5 = arith.constant 0 : index
    %c1 = arith.constant 1 : index
    %c0_6 = arith.constant 0 : index
    %5 = vector.load %arg1[%c0_5, %c1, %c0_6] : memref<1x32x64xf32, #tpu.memory_space<vmem>>, vector<1x29x64xf32>
    %6 = vector.shape_cast %5 : vector<1x29x64xf32> to vector<29x64xf32>
    %c1_7 = arith.constant 1 : index
    %c0_8 = arith.constant 0 : index
    %c0_9 = arith.constant 0 : index
    %7 = vector.load %arg2[%c1_7, %c0_8, %c0_9] : memref<4x64x128xf32, #tpu.memory_space<vmem>>, vector<1x64x128xf32>
    %8 = vector.shape_cast %7 : vector<1x64x128xf32> to vector<64x128xf32>
    %cst_10 = arith.constant dense<0.000000e+00> : vector<29x128xf32>
    %9 = tpu.matmul %6, %8, %cst_10 {dimension_numbers = #tpu.dot_dimension_numbers<[1], [0], [0], [1], [0, 0, 1, 1], [], []>} : vector<29x64xf32>, vector<64x128xf32>, vector<29x128xf32> -> vector<29x128xf32>
    %10 = arith.addf %4, %9 : vector<29x128xf32>
    %c0_11 = arith.constant 0 : index
    %c2 = arith.constant 2 : index
    %c0_12 = arith.constant 0 : index
    %11 = vector.load %arg1[%c0_11, %c2, %c0_12] : memref<1x32x64xf32, #tpu.memory_space<vmem>>, vector<1x29x64xf32>
    %12 = vector.shape_cast %11 : vector<1x29x64xf32> to vector<29x64xf32>
    %c2_13 = arith.constant 2 : index
    %c0_14 = arith.constant 0 : index
    %c0_15 = arith.constant 0 : index
    %13 = vector.load %arg2[%c2_13, %c0_14, %c0_15] : memref<4x64x128xf32, #tpu.memory_space<vmem>>, vector<1x64x128xf32>
    %14 = vector.shape_cast %13 : vector<1x64x128xf32> to vector<64x128xf32>
    %cst_16 = arith.constant dense<0.000000e+00> : vector<29x128xf32>
    %15 = tpu.matmul %12, %14, %cst_16 {dimension_numbers = #tpu.dot_dimension_numbers<[1], [0], [0], [1], [0, 0, 1, 1], [], []>} : vector<29x64xf32>, vector<64x128xf32>, vector<29x128xf32> -> vector<29x128xf32>
    %16 = arith.addf %10, %15 : vector<29x128xf32>
    %c0_17 = arith.constant 0 : index
    %c3 = arith.constant 3 : index
    %c0_18 = arith.constant 0 : index
    %17 = vector.load %arg1[%c0_17, %c3, %c0_18] : memref<1x32x64xf32, #tpu.memory_space<vmem>>, vector<1x29x64xf32>
    %18 = vector.shape_cast %17 : vector<1x29x64xf32> to vector<29x64xf32>
    %c3_19 = arith.constant 3 : index
    %c0_20 = arith.constant 0 : index
    %c0_21 = arith.constant 0 : index
    %19 = vector.load %arg2[%c3_19, %c0_20, %c0_21] : memref<4x64x128xf32, #tpu.memory_space<vmem>>, vector<1x64x128xf32>
    %20 = vector.shape_cast %19 : vector<1x64x128xf32> to vector<64x128xf32>
    %cst_22 = arith.constant dense<0.000000e+00> : vector<29x128xf32>
    %21 = tpu.matmul %18, %20, %cst_22 {dimension_numbers = #tpu.dot_dimension_numbers<[1], [0], [0], [1], [0, 0, 1, 1], [], []>} : vector<29x64xf32>, vector<64x128xf32>, vector<29x128xf32> -> vector<29x128xf32>
    %22 = arith.addf %16, %21 : vector<29x128xf32>
    %c0_23 = arith.constant 0 : index
    %c0_24 = arith.constant 0 : index
    %23 = vector.load %arg3[%c0_23, %c0_24] : memref<3x128xf32, #tpu.memory_space<vmem>>, vector<1x128xf32>
    %24 = vector.broadcast %23 : vector<1x128xf32> to vector<29x128xf32>
    %25 = arith.addf %22, %24 : vector<29x128xf32>
    %26 = arith.mulf %25, %25 : vector<29x128xf32>
    %27 = tpu.concatenate %25, %26 in 1 : vector<29x128xf32>, vector<29x128xf32> -> vector<29x256xf32>
    %c0_25 = arith.constant 0 : index
    %c0_26 = arith.constant 0 : index
    %28 = vector.load %arg6[%c0_25, %c0_26] : memref<2x29xbf16, #tpu.memory_space<vmem>>, vector<2x29xbf16>
    %cst_27 = arith.constant dense<0.000000e+00> : vector<2x256xf32>
    %29 = tpu.matmul %28, %27, %cst_27 {dimension_numbers = #tpu.dot_dimension_numbers<[1], [0], [0], [1], [0, 0, 1, 1], [], []>} : vector<2x29xbf16>, vector<29x256xf32>, vector<2x256xf32> -> vector<2x256xf32>
    %c0_28 = arith.constant 0 : index
    %c0_29 = arith.constant 0 : index
    %30 = vector.load %arg4[%c0_28, %c0_29] : memref<128x8xbf16, #tpu.memory_space<vmem>>, vector<128x8xbf16>
    %31 = vector.extract_strided_slice %29 {offsets = [0, 0], sizes = [2, 128], strides = [1, 1]} : vector<2x256xf32> to vector<2x128xf32>
    %cst_30 = arith.constant dense<0.000000e+00> : vector<2x8xf32>
    %32 = tpu.matmul %31, %30, %cst_30 {dimension_numbers = #tpu.dot_dimension_numbers<[1], [0], [0], [1], [0, 0, 1, 1], [], []>} : vector<2x128xf32>, vector<128x8xbf16>, vector<2x8xf32> -> vector<2x8xf32>
    %33 = vector.extract_strided_slice %29 {offsets = [0, 128], sizes = [2, 128], strides = [1, 1]} : vector<2x256xf32> to vector<2x128xf32>
    %cst_31 = arith.constant dense<0.000000e+00> : vector<2x8xf32>
    %34 = tpu.matmul %33, %30, %cst_31 {dimension_numbers = #tpu.dot_dimension_numbers<[1], [0], [0], [1], [0, 0, 1, 1], [], []>} : vector<2x128xf32>, vector<128x8xbf16>, vector<2x8xf32> -> vector<2x8xf32>
    %cst_32 = arith.constant 5.917160e-03 : f32
    %35 = vector.broadcast %cst_32 : f32 to vector<2x8xf32>
    %36 = arith.mulf %32, %35 : vector<2x8xf32>
    %cst_33 = arith.constant 5.917160e-03 : f32
    %37 = vector.broadcast %cst_33 : f32 to vector<2x8xf32>
    %38 = arith.mulf %34, %37 : vector<2x8xf32>
    %39 = arith.mulf %36, %36 : vector<2x8xf32>
    %40 = arith.subf %38, %39 : vector<2x8xf32>
    %cst_34 = arith.constant 0.000000e+00 : f32
    %41 = vector.broadcast %cst_34 : f32 to vector<2x8xf32>
    %42 = arith.maximumf %40, %41 : vector<2x8xf32>
    %cst_35 = arith.constant 9.99999974E-6 : f32
    %43 = vector.broadcast %cst_35 : f32 to vector<2x8xf32>
    %44 = arith.addf %42, %43 : vector<2x8xf32>
    %45 = math.rsqrt %44 : vector<2x8xf32>
    %c0_36 = arith.constant 0 : index
    %c0_37 = arith.constant 0 : index
    %46 = vector.load %arg5[%c0_36, %c0_37] : memref<8x128xbf16, #tpu.memory_space<vmem>>, vector<8x128xbf16>
    %c0_38 = arith.constant 0 : index
    %c0_39 = arith.constant 0 : index
    %47 = vector.load %arg7[%c0_38, %c0_39] : memref<29x2xbf16, #tpu.memory_space<vmem>>, vector<29x2xbf16>
    %cst_40 = arith.constant dense<0.000000e+00> : vector<2x128xf32>
    %48 = tpu.matmul %36, %46, %cst_40 {dimension_numbers = #tpu.dot_dimension_numbers<[1], [0], [0], [1], [0, 0, 1, 1], [], []>} : vector<2x8xf32>, vector<8x128xbf16>, vector<2x128xf32> -> vector<2x128xf32>
    %cst_41 = arith.constant dense<0.000000e+00> : vector<29x128xf32>
    %49 = tpu.matmul %47, %48, %cst_41 {dimension_numbers = #tpu.dot_dimension_numbers<[1], [0], [0], [1], [0, 0, 1, 1], [], []>} : vector<29x2xbf16>, vector<2x128xf32>, vector<29x128xf32> -> vector<29x128xf32>
    %cst_42 = arith.constant dense<0.000000e+00> : vector<2x128xf32>
    %50 = tpu.matmul %45, %46, %cst_42 {dimension_numbers = #tpu.dot_dimension_numbers<[1], [0], [0], [1], [0, 0, 1, 1], [], []>} : vector<2x8xf32>, vector<8x128xbf16>, vector<2x128xf32> -> vector<2x128xf32>
    %cst_43 = arith.constant dense<0.000000e+00> : vector<29x128xf32>
    %51 = tpu.matmul %47, %50, %cst_43 {dimension_numbers = #tpu.dot_dimension_numbers<[1], [0], [0], [1], [0, 0, 1, 1], [], []>} : vector<29x2xbf16>, vector<2x128xf32>, vector<29x128xf32> -> vector<29x128xf32>
    %52 = arith.subf %25, %49 : vector<29x128xf32>
    %c1_44 = arith.constant 1 : index
    %c0_45 = arith.constant 0 : index
    %53 = vector.load %arg3[%c1_44, %c0_45] : memref<3x128xf32, #tpu.memory_space<vmem>>, vector<1x128xf32>
    %54 = vector.broadcast %53 : vector<1x128xf32> to vector<29x128xf32>
    %55 = arith.mulf %51, %54 : vector<29x128xf32>
    %56 = arith.mulf %52, %55 : vector<29x128xf32>
    %c2_46 = arith.constant 2 : index
    %c0_47 = arith.constant 0 : index
    %57 = vector.load %arg3[%c2_46, %c0_47] : memref<3x128xf32, #tpu.memory_space<vmem>>, vector<1x128xf32>
    %58 = vector.broadcast %57 : vector<1x128xf32> to vector<29x128xf32>
    %59 = arith.addf %56, %58 : vector<29x128xf32>
    %cst_48 = arith.constant 0.000000e+00 : f32
    %60 = vector.broadcast %cst_48 : f32 to vector<29x128xf32>
    %61 = arith.cmpf oge, %59, %60 : vector<29x128xf32>
    %cst_49 = arith.constant 2.000000e-01 : f32
    %62 = vector.broadcast %cst_49 : f32 to vector<29x128xf32>
    %63 = arith.mulf %62, %59 : vector<29x128xf32>
    %64 = arith.select %61, %59, %63 : vector<29x128xi1>, vector<29x128xf32>
    %c0_50 = arith.constant 0 : index
    %c0_51 = arith.constant 0 : index
    %65 = vector.load %arg8[%c0_50, %c0_51] : memref<12x29xbf16, #tpu.memory_space<vmem>>, vector<12x29xbf16>
    %cst_52 = arith.constant dense<0.000000e+00> : vector<12x128xf32>
    %66 = tpu.matmul %65, %64, %cst_52 {dimension_numbers = #tpu.dot_dimension_numbers<[1], [0], [0], [1], [0, 0, 1, 1], [], []>} : vector<12x29xbf16>, vector<29x128xf32>, vector<12x128xf32> -> vector<12x128xf32>
    %c0_53 = arith.constant 0 : index
    %c0_54 = arith.constant 0 : index
    %67 = vector.load %arg9[%c0_53, %c0_54] : memref<128x128xbf16, #tpu.memory_space<vmem>>, vector<128x128xbf16>
    %cst_55 = arith.constant dense<0.000000e+00> : vector<12x128xf32>
    %68 = tpu.matmul %66, %67, %cst_55 {dimension_numbers = #tpu.dot_dimension_numbers<[1], [0], [0], [1], [0, 0, 1, 1], [], []>} : vector<12x128xf32>, vector<128x128xbf16>, vector<12x128xf32> -> vector<12x128xf32>
    %cst_56 = arith.constant 2.500000e-01 : f32
    %69 = vector.broadcast %cst_56 : f32 to vector<12x128xf32>
    %70 = arith.mulf %69, %68 : vector<12x128xf32>
    %c0_57 = arith.constant 0 : index
    %c0_58 = arith.constant 0 : index
    %c0_59 = arith.constant 0 : index
    %71 = vector.load %arg10[%c0_57, %c0_58, %c0_59] : memref<1x12x128xf32, #tpu.memory_space<vmem>>, vector<1x12x128xf32>
    %72 = vector.shape_cast %71 : vector<1x12x128xf32> to vector<12x128xf32>
    %73 = vector.shape_cast %70 : vector<12x128xf32> to vector<1x12x128xf32>
    tpu.vector_store %arg10[%c0_57, %c0_58, %c0_59], %73 {strides = array<i32>} : memref<1x12x128xf32, #tpu.memory_space<vmem>>, vector<1x12x128xf32>,
    return
  }
  func.func @transform_0(%arg0: i32) -> (i32, i32, i32) {
    %c0_i32 = arith.constant 0 : i32
    %c0_i32_0 = arith.constant 0 : i32
    %c0_i32_1 = arith.constant 0 : i32
    return %arg0, %c0_i32, %c0_i32_0 : i32, i32, i32
  }
  func.func @transform_1(%arg0: i32) -> (i32, i32, i32) {
    %c0_i32 = arith.constant 0 : i32
    %c0_i32_0 = arith.constant 0 : i32
    %c0_i32_1 = arith.constant 0 : i32
    %c0_i32_2 = arith.constant 0 : i32
    return %c0_i32, %c0_i32_0, %c0_i32_1 : i32, i32, i32
  }
  func.func @transform_2(%arg0: i32) -> (i32, i32) {
    %c0_i32 = arith.constant 0 : i32
    %c0_i32_0 = arith.constant 0 : i32
    %c0_i32_1 = arith.constant 0 : i32
    return %c0_i32, %c0_i32_0 : i32, i32
  }
  func.func @transform_3(%arg0: i32) -> (i32, i32) {
    %c0_i32 = arith.constant 0 : i32
    %c0_i32_0 = arith.constant 0 : i32
    %c0_i32_1 = arith.constant 0 : i32
    return %c0_i32, %c0_i32_0 : i32, i32
  }
  func.func @transform_4(%arg0: i32) -> (i32, i32) {
    %c0_i32 = arith.constant 0 : i32
    %c0_i32_0 = arith.constant 0 : i32
    %c0_i32_1 = arith.constant 0 : i32
    return %c0_i32, %c0_i32_0 : i32, i32
  }
  func.func @transform_5(%arg0: i32) -> (i32, i32) {
    %c0_i32 = arith.constant 0 : i32
    %c0_i32_0 = arith.constant 0 : i32
    %c0_i32_1 = arith.constant 0 : i32
    return %c0_i32, %c0_i32_0 : i32, i32
  }
  func.func @transform_6(%arg0: i32) -> (i32, i32) {
    %c0_i32 = arith.constant 0 : i32
    %c0_i32_0 = arith.constant 0 : i32
    %c0_i32_1 = arith.constant 0 : i32
    return %c0_i32, %c0_i32_0 : i32, i32
  }
  func.func @transform_7(%arg0: i32) -> (i32, i32) {
    %c0_i32 = arith.constant 0 : i32
    %c0_i32_0 = arith.constant 0 : i32
    %c0_i32_1 = arith.constant 0 : i32
    return %c0_i32, %c0_i32_0 : i32, i32
  }
  func.func @transform_8(%arg0: i32) -> (i32, i32) {
    %c0_i32 = arith.constant 0 : i32
    %c0_i32_0 = arith.constant 0 : i32
    %c0_i32_1 = arith.constant 0 : i32
    return %c0_i32, %c0_i32_0 : i32, i32
  }
  func.func @transform_9(%arg0: i32) -> (i32, i32, i32) {
    %c0_i32 = arith.constant 0 : i32
    %c0_i32_0 = arith.constant 0 : i32
    %c0_i32_1 = arith.constant 0 : i32
    return %arg0, %c0_i32, %c0_i32_0 : i32, i32, i32
  }
}

</mosaic_0001>

<llo_original>
// kernel: tpu_custom_call.1
$region0: #{tpu_custom_call.1}
  #allocation0 [shape = 'u32[]', space=smem, size = 0x4, offset = 0x4, fixed_abs, tag = 'smem constant byte address 0x4 - core index']
  #allocation1 [shape = 'u32[144,128]{1,0:T(1,128)}', space=vmem, size = 0x12000, scoped, tag = 'internal scratch']
  %s0 = inlined_call_operand.vmem [shape: f32[1,32,64], index: 0, kind: input, shape index: {}]
  %s1 = inlined_call_operand.hbm [shape: f32[4,64,128], index: 1, kind: input, shape index: {}]
  %s2 = inlined_call_operand.vmem [shape: f32[3,128], index: 2, kind: input, shape index: {}]
  %s3 = inlined_call_operand.vmem [shape: bf16[128,8], index: 3, kind: input, shape index: {}]
  %s4 = inlined_call_operand.vmem [shape: bf16[8,128], index: 4, kind: input, shape index: {}]
  %s5 = inlined_call_operand.vmem [shape: bf16[2,29], index: 5, kind: input, shape index: {}]
  %s6 = inlined_call_operand.vmem [shape: bf16[29,2], index: 6, kind: input, shape index: {}]
  %s7 = inlined_call_operand.vmem [shape: bf16[12,29], index: 7, kind: input, shape index: {}]
  %s8 = inlined_call_operand.vmem [shape: bf16[128,128], index: 8, kind: input, shape index: {}]
  %s9 = inlined_call_operand.vmem [shape: f32[1,12,128], index: 9, kind: output, shape index: {}]
  %s10 = sld [smem:[#allocation0]]
  $region50: #{tpu_custom_call.1} parent=0
    _
  %s12 = ssub.s32 1, %s10
  %s13 = scalar_select 0, %s12, %s10
  $region1: #{tpu_custom_call.1} parent=0
    #allocation2 [shape = 'u8[131072]{0}', space=vmem, size = 0x20000, scoped, tag = 'input window, operand 1, single buffered']
    #allocation3 [shape = 's32[1]{0}', space=sflag, size = 0x4, scoped, tag = 'scoped memory for tpu_custom_call.1']
    %14 = vsyncpa [#allocation3], 0
    // Predicated region
    $region2: #{tpu_custom_call.1} parent=1 // pred_check
      _
    $region3: #{tpu_custom_call.1} parent=1 // pred_check_branch
      %16 = sbr.rel (0) target = $region5
    $region4: #{tpu_custom_call.1} parent=1 // pred_region
      _
    $region5: #{tpu_custom_call.1} parent=1 // pred_fallthru
      _
    // Predicated region
    $region6: #{tpu_custom_call.1} parent=1 // pred_check
      _
    $region7: #{tpu_custom_call.1} parent=1 // pred_check_branch
      %18 = sbr.rel (0) target = $region9
    $region8: #{tpu_custom_call.1} parent=1 // pred_region
      %s20 = ssub.s32 4096, 4096
      %21 = vsyncadd [#allocation3], %s20
      %s22 = sshll.u32 [#allocation2], 4
      %s23 = int_to_ptr.vmem [resolvable:$true] %s22
      %28 = dma.hbm_to_vmem [thread:$0]  %s1, 4096, %s23, [#allocation3], 128, 128, 8
    $region9: #{tpu_custom_call.1} parent=1 // pred_fallthru
      _
    // Predicated region
    $region10: #{tpu_custom_call.1} parent=1 // pred_check
      _
    $region11: #{tpu_custom_call.1} parent=1 // pred_check_branch
      %30 = sbr.rel (0) target = $region13
    $region12: #{tpu_custom_call.1} parent=1 // pred_region
      _
    $region13: #{tpu_custom_call.1} parent=1 // pred_fallthru
      _
    // Predicated region
    $region14: #{tpu_custom_call.1} parent=1 // pred_check
      _
    $region15: #{tpu_custom_call.1} parent=1 // pred_check_branch
      %32 = sbr.rel (0) target = $region17
    $region16: #{tpu_custom_call.1} parent=1 // pred_region
      _
    $region17: #{tpu_custom_call.1} parent=1 // pred_fallthru
      _
    // Predicated region
    $region18: #{tpu_custom_call.1} parent=1 // pred_check
      _
    $region19: #{tpu_custom_call.1} parent=1 // pred_check_branch
      %34 = sbr.rel (0) target = $region21
    $region20: #{tpu_custom_call.1} parent=1 // pred_region
      _
    $region21: #{tpu_custom_call.1} parent=1 // pred_fallthru
      _
    // Predicated region
    $region22: #{tpu_custom_call.1} parent=1 // pred_check
      _
    $region23: #{tpu_custom_call.1} parent=1 // pred_check_branch
      %36 = sbr.rel (0) target = $region25
    $region24: #{tpu_custom_call.1} parent=1 // pred_region
      _
    $region25: #{tpu_custom_call.1} parent=1 // pred_fallthru
      _
    // Predicated region
    $region26: #{tpu_custom_call.1} parent=1 // pred_check
      _
    $region27: #{tpu_custom_call.1} parent=1 // pred_check_branch
      %38 = sbr.rel (0) target = $region29
    $region28: #{tpu_custom_call.1} parent=1 // pred_region
      _
    $region29: #{tpu_custom_call.1} parent=1 // pred_fallthru
      _
    // Predicated region
    $region30: #{tpu_custom_call.1} parent=1 // pred_check
      _
    $region31: #{tpu_custom_call.1} parent=1 // pred_check_branch
      %40 = sbr.rel (0) target = $region33
    $region32: #{tpu_custom_call.1} parent=1 // pred_region
      _
    $region33: #{tpu_custom_call.1} parent=1 // pred_fallthru
      _
    // Predicated region
    $region34: #{tpu_custom_call.1} parent=1 // pred_check
      _
    $region35: #{tpu_custom_call.1} parent=1 // pred_check_branch
      %42 = sbr.rel (0) target = $region37
    $region36: #{tpu_custom_call.1} parent=1 // pred_region
      _
    $region37: #{tpu_custom_call.1} parent=1 // pred_fallthru
      _
    // Predicated region
    $region38: #{tpu_custom_call.1} parent=1 // pred_check
      _
    $region39: #{tpu_custom_call.1} parent=1 // pred_check_branch
      %44 = sbr.rel (0) target = $region41
    $region40: #{tpu_custom_call.1} parent=1 // pred_region
      %45 = dma.done [#allocation3], 4096
    $region41: #{tpu_custom_call.1} parent=1 // pred_fallthru
      _
    %v47 = vld [vmem:[%s0] sm:$0xff]
    %v48 = vld [vmem:[%s0 + $0x8] sm:$0xff]
    %v49 = vld [vmem:[%s0 + $0x10] sm:$0xff]
    %v50 = vld [vmem:[%s0 + $0x18] sm:$0x1f]
    %v51 = vld [vmem:[#allocation2] sm:$0xff]
    %v52 = vld [vmem:[#allocation2 + $0x8] sm:$0xff]
    %v53 = vld [vmem:[#allocation2 + $0x10] sm:$0xff]
    %v54 = vld [vmem:[#allocation2 + $0x18] sm:$0xff]
    %v55 = vld [vmem:[#allocation2 + $0x20] sm:$0xff]
    %v56 = vld [vmem:[#allocation2 + $0x28] sm:$0xff]
    %v57 = vld [vmem:[#allocation2 + $0x30] sm:$0xff]
    %v58 = vld [vmem:[#allocation2 + $0x38] sm:$0xff]
    %v59 = vld [vmem:[%s0 + $0x1] sm:$0xff]
    %v60 = vld [vmem:[%s0 + $0x9] sm:$0xff]
    %v61 = vld [vmem:[%s0 + $0x11] sm:$0xff]
    %v62 = vld [vmem:[%s0 + $0x19] sm:$0x1f]
    %s63 = scalar_lea.vmem [#allocation2], 64
    %v64 = vld [vmem:[%s63] sm:$0xff]
    %v65 = vld [vmem:[%s63 + $0x8] sm:$0xff]
    %v66 = vld [vmem:[%s63 + $0x10] sm:$0xff]
    %v67 = vld [vmem:[%s63 + $0x18] sm:$0xff]
    %v68 = vld [vmem:[%s63 + $0x20] sm:$0xff]
    %v69 = vld [vmem:[%s63 + $0x28] sm:$0xff]
    %v70 = vld [vmem:[%s63 + $0x30] sm:$0xff]
    %v71 = vld [vmem:[%s63 + $0x38] sm:$0xff]
    %vm72 = vcmask 523264
    %v74 = vsel %vm72, %v59, 0
    %v77 = vsel %vm72, %v60, 0
    %v80 = vsel %vm72, %v61, 0
    %v83 = vsel %vm72, %v62, 0
    %85 = vmatprep.subr.mxu0 0.0
    %86 = vmatpush1.msra.mxu0 %v64
    %87 = vmatprep.subr.mxu0 0.0
    %88 = vmatpush1.msra.mxu0 %v65
    %89 = vmatprep.subr.mxu0 0.0
    %90 = vmatpush1.msra.mxu0 %v66
    %91 = vmatprep.subr.mxu0 0.0
    %92 = vmatpush1.msra.mxu0 %v67
    %93 = vmatprep.subr.mxu0 0.0
    %94 = vmatpush1.msra.mxu0 %v68
    %95 = vmatprep.subr.mxu0 0.0
    %96 = vmatpush1.msra.mxu0 %v69
    %97 = vmatprep.subr.mxu0 0.0
    %98 = vmatpush1.msra.mxu0 %v70
    %99 = vmatprep.subr.mxu0 0.0
    %100 = vmatpush1.msra.mxu0 %v71
    %101 = vmatprep.subr.mxu0 0.0
    %102 = vmatpush1.msra.mxu0 0.0
    %103 = vmatprep.subr.mxu0 0.0
    %104 = vmatpush1.msra.mxu0 0.0
    %105 = vmatprep.subr.mxu0 0.0
    %106 = vmatpush1.msra.mxu0 0.0
    %107 = vmatprep.subr.mxu0 0.0
    %108 = vmatpush1.msra.mxu0 0.0
    %109 = vmatprep.subr.mxu0 0.0
    %110 = vmatpush1.msra.mxu0 0.0
    %111 = vmatprep.subr.mxu0 0.0
    %112 = vmatpush1.msra.mxu0 0.0
    %113 = vmatprep.subr.mxu0 0.0
    %114 = vmatpush1.msra.mxu0 0.0
    %115 = vmatprep.subr.mxu0 0.0
    %116 = vmatpush1.msra.mxu0 0.0
    %117 = vmatprep.subr.mxu0 0.0
    %118 = vmatpush1.msra.mxu0 0.0
    %119 = vmatprep.subr.mxu0 0.0
    %120 = vmatpush1.msra.mxu0 0.0
    %121 = vmatprep.subr.mxu0 0.0
    %122 = vmatpush1.msra.mxu0 0.0
    %123 = vmatprep.subr.mxu0 0.0
    %124 = vmatpush1.msra.mxu0 0.0
    %125 = vmatprep.subr.mxu0 0.0
    %126 = vmatpush1.msra.mxu0 0.0
    %127 = vmatprep.subr.mxu0 0.0
    %128 = vmatpush1.msra.mxu0 0.0
    %129 = vmatprep.subr.mxu0 0.0
    %130 = vmatpush1.msra.mxu0 0.0
    %131 = vmatprep.subr.mxu0 0.0
    %132 = vmatpush1.msra.mxu0 0.0
    %133 = vmatprep.subr.mxu0 0.0
    %134 = vmatpush1.msra.mxu0 0.0
    %135 = vmatprep.subr.mxu0 0.0
    %136 = vmatpush1.msra.mxu0 0.0
    %137 = vmatprep.subr.mxu0 0.0
    %138 = vmatpush1.msra.mxu0 0.0
    %139 = vmatprep.subr.mxu0 0.0
    %140 = vmatpush1.msra.mxu0 0.0
    %141 = vmatprep.subr.mxu0 0.0
    %142 = vmatpush1.msra.mxu0 0.0
    %143 = vmatprep.subr.mxu0 0.0
    %144 = vmatpush1.msra.mxu0 0.0
    %145 = vmatprep.subr.mxu0 0.0
    %146 = vmatpush1.msra.mxu0 0.0
    %147 = vmatprep.subr.mxu0 0.0
    %148 = vmatpush1.msra.mxu0 0.0
    %149 = vmatprep.mubr.f32.mxu0 0.0
    %150 = vmatmul.mubr.f32.gmra.mrb[0].mxu0 %v74
    %v151 = vpop.f32.mrb[0].mxu0
    %v152 = vadd.f32 0.0, %v151
    %v153 = vpop.f32.mrb[0].mxu0
    %154 = vmatprep.mubr.f32.mxu0 0.0
    %155 = vmatmul.mubr.f32.gmra.mrb[0].mxu0 %v77
    %v156 = vpop.f32.mrb[0].mxu0
    %v157 = vadd.f32 0.0, %v156
    %v158 = vpop.f32.mrb[0].mxu0
    %159 = vmatprep.mubr.f32.mxu0 0.0
    %160 = vmatmul.mubr.f32.gmra.mrb[0].mxu0 %v80
    %v161 = vpop.f32.mrb[0].mxu0
    %v162 = vadd.f32 0.0, %v161
    %v163 = vpop.f32.mrb[0].mxu0
    %164 = vmatprep.mubr.f32.mxu0 0.0
    %165 = vmatmul.mubr.f32.gmra.mrb[0].mxu0 %v83
    %v166 = vpop.f32.mrb[0].mxu0
    %v167 = vadd.f32 0.0, %v166
    %v168 = vpop.f32.mrb[0].mxu0
    %169 = vdwg.mxu0
    %v171 = vsel %vm72, %v47, 0
    %v174 = vsel %vm72, %v48, 0
    %v177 = vsel %vm72, %v49, 0
    %v180 = vsel %vm72, %v50, 0
    %182 = vmatprep.subr.mxu0 0.0
    %183 = vmatpush1.msra.mxu0 %v51
    %184 = vmatprep.subr.mxu0 0.0
    %185 = vmatpush1.msra.mxu0 %v52
    %186 = vmatprep.subr.mxu0 0.0
    %187 = vmatpush1.msra.mxu0 %v53
    %188 = vmatprep.subr.mxu0 0.0
    %189 = vmatpush1.msra.mxu0 %v54
    %190 = vmatprep.subr.mxu0 0.0
    %191 = vmatpush1.msra.mxu0 %v55
    %192 = vmatprep.subr.mxu0 0.0
    %193 = vmatpush1.msra.mxu0 %v56
    %194 = vmatprep.subr.mxu0 0.0
    %195 = vmatpush1.msra.mxu0 %v57
    %196 = vmatprep.subr.mxu0 0.0
    %197 = vmatpush1.msra.mxu0 %v58
    %198 = vmatprep.subr.mxu0 0.0
    %199 = vmatpush1.msra.mxu0 0.0
    %200 = vmatprep.subr.mxu0 0.0
    %201 = vmatpush1.msra.mxu0 0.0
    %202 = vmatprep.subr.mxu0 0.0
    %203 = vmatpush1.msra.mxu0 0.0
    %204 = vmatprep.subr.mxu0 0.0
    %205 = vmatpush1.msra.mxu0 0.0
    %206 = vmatprep.subr.mxu0 0.0
    %207 = vmatpush1.msra.mxu0 0.0
    %208 = vmatprep.subr.mxu0 0.0
    %209 = vmatpush1.msra.mxu0 0.0
    %210 = vmatprep.subr.mxu0 0.0
    %211 = vmatpush1.msra.mxu0 0.0
    %212 = vmatprep.subr.mxu0 0.0
    %213 = vmatpush1.msra.mxu0 0.0
    %214 = vmatprep.subr.mxu0 0.0
    %215 = vmatpush1.msra.mxu0 0.0
    %216 = vmatprep.subr.mxu0 0.0
    %217 = vmatpush1.msra.mxu0 0.0
    %218 = vmatprep.subr.mxu0 0.0
    %219 = vmatpush1.msra.mxu0 0.0
    %220 = vmatprep.subr.mxu0 0.0
    %221 = vmatpush1.msra.mxu0 0.0
    %222 = vmatprep.subr.mxu0 0.0
    %223 = vmatpush1.msra.mxu0 0.0
    %224 = vmatprep.subr.mxu0 0.0
    %225 = vmatpush1.msra.mxu0 0.0
    %226 = vmatprep.subr.mxu0 0.0
    %227 = vmatpush1.msra.mxu0 0.0
    %228 = vmatprep.subr.mxu0 0.0
    %229 = vmatpush1.msra.mxu0 0.0
    %230 = vmatprep.subr.mxu0 0.0
    %231 = vmatpush1.msra.mxu0 0.0
    %232 = vmatprep.subr.mxu0 0.0
    %233 = vmatpush1.msra.mxu0 0.0
    %234 = vmatprep.subr.mxu0 0.0
    %235 = vmatpush1.msra.mxu0 0.0
    %236 = vmatprep.subr.mxu0 0.0
    %237 = vmatpush1.msra.mxu0 0.0
    %238 = vmatprep.subr.mxu0 0.0
    %239 = vmatpush1.msra.mxu0 0.0
    %240 = vmatprep.subr.mxu0 0.0
    %241 = vmatpush1.msra.mxu0 0.0
    %242 = vmatprep.subr.mxu0 0.0
    %243 = vmatpush1.msra.mxu0 0.0
    %244 = vmatprep.subr.mxu0 0.0
    %245 = vmatpush1.msra.mxu0 0.0
    %246 = vmatprep.mubr.f32.mxu0 0.0
    %247 = vmatmul.mubr.f32.gmra.mrb[0].mxu0 %v171
    %v248 = vpop.f32.mrb[0].mxu0
    %v249 = vadd.f32 %v152, %v248
    %v250 = vpop.f32.mrb[0].mxu0
    %251 = vmatprep.mubr.f32.mxu0 0.0
    %252 = vmatmul.mubr.f32.gmra.mrb[0].mxu0 %v174
    %v253 = vpop.f32.mrb[0].mxu0
    %v254 = vadd.f32 %v157, %v253
    %v255 = vpop.f32.mrb[0].mxu0
    %256 = vmatprep.mubr.f32.mxu0 0.0
    %257 = vmatmul.mubr.f32.gmra.mrb[0].mxu0 %v177
    %v258 = vpop.f32.mrb[0].mxu0
    %v259 = vadd.f32 %v162, %v258
    %v260 = vpop.f32.mrb[0].mxu0
    %261 = vmatprep.mubr.f32.mxu0 0.0
    %262 = vmatmul.mubr.f32.gmra.mrb[0].mxu0 %v180
    %v263 = vpop.f32.mrb[0].mxu0
    %v264 = vadd.f32 %v167, %v263
    %v265 = vpop.f32.mrb[0].mxu0
    %266 = vdwg.mxu0
    %v267 = vld [vmem:[%s0 + $0x2] sm:$0xff]
    %v268 = vld [vmem:[%s0 + $0xa] sm:$0xff]
    %v269 = vld [vmem:[%s0 + $0x12] sm:$0xff]
    %v270 = vld [vmem:[%s0 + $0x1a] sm:$0x1f]
    %s271 = scalar_lea.vmem [#allocation2], 128
    %v272 = vld [vmem:[%s271] sm:$0xff]
    %v273 = vld [vmem:[%s271 + $0x8] sm:$0xff]
    %v274 = vld [vmem:[%s271 + $0x10] sm:$0xff]
    %v275 = vld [vmem:[%s271 + $0x18] sm:$0xff]
    %v276 = vld [vmem:[%s271 + $0x20] sm:$0xff]
    %v277 = vld [vmem:[%s271 + $0x28] sm:$0xff]
    %v278 = vld [vmem:[%s271 + $0x30] sm:$0xff]
    %v279 = vld [vmem:[%s271 + $0x38] sm:$0xff]
    %v281 = vsel %vm72, %v267, 0
    %v284 = vsel %vm72, %v268, 0
    %v287 = vsel %vm72, %v269, 0
    %v290 = vsel %vm72, %v270, 0
    %292 = vmatprep.subr.mxu0 0.0
    %293 = vmatpush1.msra.mxu0 %v272
    %294 = vmatprep.subr.mxu0 0.0
    %295 = vmatpush1.msra.mxu0 %v273
    %296 = vmatprep.subr.mxu0 0.0
    %297 = vmatpush1.msra.mxu0 %v274
    %298 = vmatprep.subr.mxu0 0.0
    %299 = vmatpush1.msra.mxu0 %v275
    %300 = vmatprep.subr.mxu0 0.0
    %301 = vmatpush1.msra.mxu0 %v276
    %302 = vmatprep.subr.mxu0 0.0
    %303 = vmatpush1.msra.mxu0 %v277
    %304 = vmatprep.subr.mxu0 0.0
    %305 = vmatpush1.msra.mxu0 %v278
    %306 = vmatprep.subr.mxu0 0.0
    %307 = vmatpush1.msra.mxu0 %v279
    %308 = vmatprep.subr.mxu0 0.0
    %309 = vmatpush1.msra.mxu0 0.0
    %310 = vmatprep.subr.mxu0 0.0
    %311 = vmatpush1.msra.mxu0 0.0
    %312 = vmatprep.subr.mxu0 0.0
    %313 = vmatpush1.msra.mxu0 0.0
    %314 = vmatprep.subr.mxu0 0.0
    %315 = vmatpush1.msra.mxu0 0.0
    %316 = vmatprep.subr.mxu0 0.0
    %317 = vmatpush1.msra.mxu0 0.0
    %318 = vmatprep.subr.mxu0 0.0
    %319 = vmatpush1.msra.mxu0 0.0
    %320 = vmatprep.subr.mxu0 0.0
    %321 = vmatpush1.msra.mxu0 0.0
    %322 = vmatprep.subr.mxu0 0.0
    %323 = vmatpush1.msra.mxu0 0.0
    %324 = vmatprep.subr.mxu0 0.0
    %325 = vmatpush1.msra.mxu0 0.0
    %326 = vmatprep.subr.mxu0 0.0
    %327 = vmatpush1.msra.mxu0 0.0
    %328 = vmatprep.subr.mxu0 0.0
    %329 = vmatpush1.msra.mxu0 0.0
    %330 = vmatprep.subr.mxu0 0.0
    %331 = vmatpush1.msra.mxu0 0.0
    %332 = vmatprep.subr.mxu0 0.0
    %333 = vmatpush1.msra.mxu0 0.0
    %334 = vmatprep.subr.mxu0 0.0
    %335 = vmatpush1.msra.mxu0 0.0
    %336 = vmatprep.subr.mxu0 0.0
    %337 = vmatpush1.msra.mxu0 0.0
    %338 = vmatprep.subr.mxu0 0.0
    %339 = vmatpush1.msra.mxu0 0.0
    %340 = vmatprep.subr.mxu0 0.0
    %341 = vmatpush1.msra.mxu0 0.0
    %342 = vmatprep.subr.mxu0 0.0
    %343 = vmatpush1.msra.mxu0 0.0
    %344 = vmatprep.subr.mxu0 0.0
    %345 = vmatpush1.msra.mxu0 0.0
    %346 = vmatprep.subr.mxu0 0.0
    %347 = vmatpush1.msra.mxu0 0.0
    %348 = vmatprep.subr.mxu0 0.0
    %349 = vmatpush1.msra.mxu0 0.0
    %350 = vmatprep.subr.mxu0 0.0
    %351 = vmatpush1.msra.mxu0 0.0
    %352 = vmatprep.subr.mxu0 0.0
    %353 = vmatpush1.msra.mxu0 0.0
    %354 = vmatprep.subr.mxu0 0.0
    %355 = vmatpush1.msra.mxu0 0.0
    %356 = vmatprep.mubr.f32.mxu0 0.0
    %357 = vmatmul.mubr.f32.gmra.mrb[0].mxu0 %v281
    %v358 = vpop.f32.mrb[0].mxu0
    %v359 = vadd.f32 0.0, %v358
    %v360 = vpop.f32.mrb[0].mxu0
    %361 = vmatprep.mubr.f32.mxu0 0.0
    %362 = vmatmul.mubr.f32.gmra.mrb[0].mxu0 %v284
    %v363 = vpop.f32.mrb[0].mxu0
    %v364 = vadd.f32 0.0, %v363
    %v365 = vpop.f32.mrb[0].mxu0
    %366 = vmatprep.mubr.f32.mxu0 0.0
    %367 = vmatmul.mubr.f32.gmra.mrb[0].mxu0 %v287
    %v368 = vpop.f32.mrb[0].mxu0
    %v369 = vadd.f32 0.0, %v368
    %v370 = vpop.f32.mrb[0].mxu0
    %371 = vmatprep.mubr.f32.mxu0 0.0
    %372 = vmatmul.mubr.f32.gmra.mrb[0].mxu0 %v290
    %v373 = vpop.f32.mrb[0].mxu0
    %v374 = vadd.f32 0.0, %v373
    %v375 = vpop.f32.mrb[0].mxu0
    %376 = vdwg.mxu0
    %v377 = vadd.f32 %v249, %v359
    %v378 = vadd.f32 %v254, %v364
    %v379 = vadd.f32 %v259, %v369
    %v380 = vadd.f32 %v264, %v374
    %v381 = vld [vmem:[%s0 + $0x3] sm:$0xff]
    %v382 = vld [vmem:[%s0 + $0xb] sm:$0xff]
    %v383 = vld [vmem:[%s0 + $0x13] sm:$0xff]
    %v384 = vld [vmem:[%s0 + $0x1b] sm:$0x1f]
    %s385 = scalar_lea.vmem [#allocation2], 192
    %v386 = vld [vmem:[%s385] sm:$0xff]
    %v387 = vld [vmem:[%s385 + $0x8] sm:$0xff]
    %v388 = vld [vmem:[%s385 + $0x10] sm:$0xff]
    %v389 = vld [vmem:[%s385 + $0x18] sm:$0xff]
    %v390 = vld [vmem:[%s385 + $0x20] sm:$0xff]
    %v391 = vld [vmem:[%s385 + $0x28] sm:$0xff]
    %v392 = vld [vmem:[%s385 + $0x30] sm:$0xff]
    %v393 = vld [vmem:[%s385 + $0x38] sm:$0xff]
    %v395 = vsel %vm72, %v381, 0
    %v398 = vsel %vm72, %v382, 0
    %v401 = vsel %vm72, %v383, 0
    %v404 = vsel %vm72, %v384, 0
    %406 = vmatprep.subr.mxu0 0.0
    %407 = vmatpush1.msra.mxu0 %v386
    %408 = vmatprep.subr.mxu0 0.0
    %409 = vmatpush1.msra.mxu0 %v387
    %410 = vmatprep.subr.mxu0 0.0
    %411 = vmatpush1.msra.mxu0 %v388
    %412 = vmatprep.subr.mxu0 0.0
    %413 = vmatpush1.msra.mxu0 %v389
    %414 = vmatprep.subr.mxu0 0.0
    %415 = vmatpush1.msra.mxu0 %v390
    %416 = vmatprep.subr.mxu0 0.0
    %417 = vmatpush1.msra.mxu0 %v391
    %418 = vmatprep.subr.mxu0 0.0
    %419 = vmatpush1.msra.mxu0 %v392
    %420 = vmatprep.subr.mxu0 0.0
    %421 = vmatpush1.msra.mxu0 %v393
    %422 = vmatprep.subr.mxu0 0.0
    %423 = vmatpush1.msra.mxu0 0.0
    %424 = vmatprep.subr.mxu0 0.0
    %425 = vmatpush1.msra.mxu0 0.0
    %426 = vmatprep.subr.mxu0 0.0
    %427 = vmatpush1.msra.mxu0 0.0
    %428 = vmatprep.subr.mxu0 0.0
    %429 = vmatpush1.msra.mxu0 0.0
    %430 = vmatprep.subr.mxu0 0.0
    %431 = vmatpush1.msra.mxu0 0.0
    %432 = vmatprep.subr.mxu0 0.0
    %433 = vmatpush1.msra.mxu0 0.0
    %434 = vmatprep.subr.mxu0 0.0
    %435 = vmatpush1.msra.mxu0 0.0
    %436 = vmatprep.subr.mxu0 0.0
    %437 = vmatpush1.msra.mxu0 0.0
    %438 = vmatprep.subr.mxu0 0.0
    %439 = vmatpush1.msra.mxu0 0.0
    %440 = vmatprep.subr.mxu0 0.0
    %441 = vmatpush1.msra.mxu0 0.0
    %442 = vmatprep.subr.mxu0 0.0
    %443 = vmatpush1.msra.mxu0 0.0
    %444 = vmatprep.subr.mxu0 0.0
    %445 = vmatpush1.msra.mxu0 0.0
    %446 = vmatprep.subr.mxu0 0.0
    %447 = vmatpush1.msra.mxu0 0.0
    %448 = vmatprep.subr.mxu0 0.0
    %449 = vmatpush1.msra.mxu0 0.0
    %450 = vmatprep.subr.mxu0 0.0
    %451 = vmatpush1.msra.mxu0 0.0
    %452 = vmatprep.subr.mxu0 0.0
    %453 = vmatpush1.msra.mxu0 0.0
    %454 = vmatprep.subr.mxu0 0.0
    %455 = vmatpush1.msra.mxu0 0.0
    %456 = vmatprep.subr.mxu0 0.0
    %457 = vmatpush1.msra.mxu0 0.0
    %458 = vmatprep.subr.mxu0 0.0
    %459 = vmatpush1.msra.mxu0 0.0
    %460 = vmatprep.subr.mxu0 0.0
    %461 = vmatpush1.msra.mxu0 0.0
    %462 = vmatprep.subr.mxu0 0.0
    %463 = vmatpush1.msra.mxu0 0.0
    %464 = vmatprep.subr.mxu0 0.0
    %465 = vmatpush1.msra.mxu0 0.0
    %466 = vmatprep.subr.mxu0 0.0
    %467 = vmatpush1.msra.mxu0 0.0
    %468 = vmatprep.subr.mxu0 0.0
    %469 = vmatpush1.msra.mxu0 0.0
    %470 = vmatprep.mubr.f32.mxu0 0.0
    %471 = vmatmul.mubr.f32.gmra.mrb[0].mxu0 %v395
    %v472 = vpop.f32.mrb[0].mxu0
    %v473 = vadd.f32 0.0, %v472
    %v474 = vpop.f32.mrb[0].mxu0
    %475 = vmatprep.mubr.f32.mxu0 0.0
    %476 = vmatmul.mubr.f32.gmra.mrb[0].mxu0 %v398
    %v477 = vpop.f32.mrb[0].mxu0
    %v478 = vadd.f32 0.0, %v477
    %v479 = vpop.f32.mrb[0].mxu0
    %480 = vmatprep.mubr.f32.mxu0 0.0
    %481 = vmatmul.mubr.f32.gmra.mrb[0].mxu0 %v401
    %v482 = vpop.f32.mrb[0].mxu0
    %v483 = vadd.f32 0.0, %v482
    %v484 = vpop.f32.mrb[0].mxu0
    %485 = vmatprep.mubr.f32.mxu0 0.0
    %486 = vmatmul.mubr.f32.gmra.mrb[0].mxu0 %v404
    %v487 = vpop.f32.mrb[0].mxu0
    %v488 = vadd.f32 0.0, %v487
    %v489 = vpop.f32.mrb[0].mxu0
    %490 = vdwg.mxu0
    %v491 = vadd.f32 %v377, %v473
    %v492 = vadd.f32 %v378, %v478
    %v493 = vadd.f32 %v379, %v483
    %v494 = vadd.f32 %v380, %v488
    %v495 = vld [vmem:[%s2] sm:$0x1]
    %v496 = vlaneseq
    %v497 = vshrl.u32 %v496, 7
    %v498 = vsub.s32 0, %v497
    %v499 = vrot.slane %v495, %v498
    %v500 = vadd.f32 %v491, %v499
    %v501 = vadd.f32 %v492, %v499
    %v502 = vadd.f32 %v493, %v499
    %v503 = vadd.f32 %v494, %v499
    %v504 = vmul.f32 %v500, %v500
    %v505 = vmul.f32 %v501, %v501
    %v506 = vmul.f32 %v502, %v502
    %v507 = vmul.f32 %v503, %v503
    %v508 = vld [vmem:[%s5] sm:$0x1]
    %vm509 = vcmask 236544
    %v511 = vsel %vm509, %v508, 0
    %vm513 = vcmask 1044480
    %v515 = vsel %vm513, %v503, 0
    %v518 = vsel %vm513, %v507, 0
    %520 = vmatprep.subr.mxu0 %v504
    %521 = vmatpush1.msra.mxu0 %v500
    %522 = vmatprep.subr.mxu0 %v505
    %523 = vmatpush1.msra.mxu0 %v501
    %524 = vmatprep.subr.mxu0 %v506
    %525 = vmatpush1.msra.mxu0 %v502
    %526 = vmatprep.subr.mxu0 %v518
    %527 = vmatpush1.msra.mxu0 %v515
    %528 = vmatprep.subr.mxu0 0.0
    %529 = vmatpush1.msra.mxu0 0.0
    %530 = vmatprep.subr.mxu0 0.0
    %531 = vmatpush1.msra.mxu0 0.0
    %532 = vmatprep.subr.mxu0 0.0
    %533 = vmatpush1.msra.mxu0 0.0
    %534 = vmatprep.subr.mxu0 0.0
    %535 = vmatpush1.msra.mxu0 0.0
    %536 = vmatprep.subr.mxu0 0.0
    %537 = vmatpush1.msra.mxu0 0.0
    %538 = vmatprep.subr.mxu0 0.0
    %539 = vmatpush1.msra.mxu0 0.0
    %540 = vmatprep.subr.mxu0 0.0
    %541 = vmatpush1.msra.mxu0 0.0
    %542 = vmatprep.subr.mxu0 0.0
    %543 = vmatpush1.msra.mxu0 0.0
    %544 = vmatprep.subr.mxu0 0.0
    %545 = vmatpush1.msra.mxu0 0.0
    %546 = vmatprep.subr.mxu0 0.0
    %547 = vmatpush1.msra.mxu0 0.0
    %548 = vmatprep.subr.mxu0 0.0
    %549 = vmatpush1.msra.mxu0 0.0
    %550 = vmatprep.subr.mxu0 0.0
    %551 = vmatpush1.msra.mxu0 0.0
    %552 = vmatprep.subr.mxu0 0.0
    %553 = vmatpush1.msra.mxu0 0.0
    %554 = vmatprep.subr.mxu0 0.0
    %555 = vmatpush1.msra.mxu0 0.0
    %556 = vmatprep.subr.mxu0 0.0
    %557 = vmatpush1.msra.mxu0 0.0
    %558 = vmatprep.subr.mxu0 0.0
    %559 = vmatpush1.msra.mxu0 0.0
    %560 = vmatprep.subr.mxu0 0.0
    %561 = vmatpush1.msra.mxu0 0.0
    %562 = vmatprep.subr.mxu0 0.0
    %563 = vmatpush1.msra.mxu0 0.0
    %564 = vmatprep.subr.mxu0 0.0
    %565 = vmatpush1.msra.mxu0 0.0
    %566 = vmatprep.subr.mxu0 0.0
    %567 = vmatpush1.msra.mxu0 0.0
    %568 = vmatprep.subr.mxu0 0.0
    %569 = vmatpush1.msra.mxu0 0.0
    %570 = vmatprep.subr.mxu0 0.0
    %571 = vmatpush1.msra.mxu0 0.0
    %572 = vmatprep.subr.mxu0 0.0
    %573 = vmatpush1.msra.mxu0 0.0
    %574 = vmatprep.subr.mxu0 0.0
    %575 = vmatpush1.msra.mxu0 0.0
    %576 = vmatprep.subr.mxu0 0.0
    %577 = vmatpush1.msra.mxu0 0.0
    %578 = vmatprep.subr.mxu0 0.0
    %579 = vmatpush1.msra.mxu0 0.0
    %580 = vmatprep.subr.mxu0 0.0
    %581 = vmatpush1.msra.mxu0 0.0
    %582 = vmatprep.subr.mxu0 0.0
    %583 = vmatpush1.msra.mxu0 0.0
    %584 = vmatprep.mubr.bf16.mxu0 0
    %585 = vmatmul.mubr.bf16.gmra.mrb[0].mxu0 %v511
    %v586 = vpop.f32.mrb[0].mxu0
    %v587 = vadd.f32 0.0, %v586
    %v588 = vpop.f32.mrb[0].mxu0
    %v589 = vadd.f32 0.0, %v588
    %v590 = vpop.f32.mrb[0].mxu0
    %v591 = vpop.f32.mrb[0].mxu0
    %592 = vdwg.mxu0
    %v593 = vld [vmem:[%s3] sm:$0xf]
    %v594 = vld [vmem:[%s3 + $0x4] sm:$0xf]
    %v595 = vld [vmem:[%s3 + $0x8] sm:$0xf]
    %v596 = vld [vmem:[%s3 + $0xc] sm:$0xf]
    %v597 = vld [vmem:[%s3 + $0x10] sm:$0xf]
    %v598 = vld [vmem:[%s3 + $0x14] sm:$0xf]
    %v599 = vld [vmem:[%s3 + $0x18] sm:$0xf]
    %v600 = vld [vmem:[%s3 + $0x1c] sm:$0xf]
    %v601 = vld [vmem:[%s3 + $0x20] sm:$0xf]
    %v602 = vld [vmem:[%s3 + $0x24] sm:$0xf]
    %v603 = vld [vmem:[%s3 + $0x28] sm:$0xf]
    %v604 = vld [vmem:[%s3 + $0x2c] sm:$0xf]
    %v605 = vld [vmem:[%s3 + $0x30] sm:$0xf]
    %v606 = vld [vmem:[%s3 + $0x34] sm:$0xf]
    %v607 = vld [vmem:[%s3 + $0x38] sm:$0xf]
    %v608 = vld [vmem:[%s3 + $0x3c] sm:$0xf]
    %v625 = vunpack.c.l.b16 %v593
    %v626 = vunpack.c.l.b16 %v594
    %v627 = vunpack.c.l.b16 %v595
    %v628 = vunpack.c.l.b16 %v596
    %v629 = vunpack.c.l.b16 %v597
    %v630 = vunpack.c.l.b16 %v598
    %v631 = vunpack.c.l.b16 %v599
    %v632 = vunpack.c.l.b16 %v600
    %v633 = vunpack.c.l.b16 %v601
    %v634 = vunpack.c.l.b16 %v602
    %v635 = vunpack.c.l.b16 %v603
    %v636 = vunpack.c.l.b16 %v604
    %v637 = vunpack.c.l.b16 %v605
    %v638 = vunpack.c.l.b16 %v606
    %v639 = vunpack.c.l.b16 %v607
    %v640 = vunpack.c.l.b16 %v608
    %v641 = vpack.c.b16 %v626, %v625
    %v642 = vpack.c.b16 %v628, %v627
    %v643 = vpack.c.b16 %v630, %v629
    %v644 = vpack.c.b16 %v632, %v631
    %v645 = vpack.c.b16 %v634, %v633
    %v646 = vpack.c.b16 %v636, %v635
    %v647 = vpack.c.b16 %v638, %v637
    %v648 = vpack.c.b16 %v640, %v639
    %657 = vmatprep.subr.bf16.mxu0 0
    %658 = vmatpush1.bf16.msra.mxu0 %v641
    %659 = vmatprep.subr.bf16.mxu0 0
    %660 = vmatpush1.bf16.msra.mxu0 %v642
    %661 = vmatprep.subr.bf16.mxu0 0
    %662 = vmatpush1.bf16.msra.mxu0 %v643
    %663 = vmatprep.subr.bf16.mxu0 0
    %664 = vmatpush1.bf16.msra.mxu0 %v644
    %665 = vmatprep.subr.bf16.mxu0 0
    %666 = vmatpush1.bf16.msra.mxu0 %v645
    %667 = vmatprep.subr.bf16.mxu0 0
    %668 = vmatpush1.bf16.msra.mxu0 %v646
    %669 = vmatprep.subr.bf16.mxu0 0
    %670 = vmatpush1.bf16.msra.mxu0 %v647
    %671 = vmatprep.subr.bf16.mxu0 0
    %672 = vmatpush1.bf16.msra.mxu0 %v648
    %673 = vmatprep.subr.bf16.mxu0 0
    %674 = vmatpush1.bf16.msra.mxu0 0
    %675 = vmatprep.subr.bf16.mxu0 0
    %676 = vmatpush1.bf16.msra.mxu0 0
    %677 = vmatprep.subr.bf16.mxu0 0
    %678 = vmatpush1.bf16.msra.mxu0 0
    %679 = vmatprep.subr.bf16.mxu0 0
    %680 = vmatpush1.bf16.msra.mxu0 0
    %681 = vmatprep.subr.bf16.mxu0 0
    %682 = vmatpush1.bf16.msra.mxu0 0
    %683 = vmatprep.subr.bf16.mxu0 0
    %684 = vmatpush1.bf16.msra.mxu0 0
    %685 = vmatprep.subr.bf16.mxu0 0
    %686 = vmatpush1.bf16.msra.mxu0 0
    %687 = vmatprep.subr.bf16.mxu0 0
    %688 = vmatpush1.bf16.msra.mxu0 0
    %689 = vmatprep.mubr.f32.mxu0 0.0
    %690 = vmatmul.mubr.f32.gmra.mrb[0].mxu0 %v587
    %v691 = vpop.f32.mrb[0].mxu0
    %v692 = vadd.f32 0.0, %v691
    %v693 = vpop.f32.mrb[0].mxu0
    %694 = vdwg.mxu0
    %695 = vmatprep.subr.bf16.mxu0 0
    %696 = vmatpush1.bf16.msra.mxu0 %v641
    %697 = vmatprep.subr.bf16.mxu0 0
    %698 = vmatpush1.bf16.msra.mxu0 %v642
    %699 = vmatprep.subr.bf16.mxu0 0
    %700 = vmatpush1.bf16.msra.mxu0 %v643
    %701 = vmatprep.subr.bf16.mxu0 0
    %702 = vmatpush1.bf16.msra.mxu0 %v644
    %703 = vmatprep.subr.bf16.mxu0 0
    %704 = vmatpush1.bf16.msra.mxu0 %v645
    %705 = vmatprep.subr.bf16.mxu0 0
    %706 = vmatpush1.bf16.msra.mxu0 %v646
    %707 = vmatprep.subr.bf16.mxu0 0
    %708 = vmatpush1.bf16.msra.mxu0 %v647
    %709 = vmatprep.subr.bf16.mxu0 0
    %710 = vmatpush1.bf16.msra.mxu0 %v648
    %711 = vmatprep.subr.bf16.mxu0 0
    %712 = vmatpush1.bf16.msra.mxu0 0
    %713 = vmatprep.subr.bf16.mxu0 0
    %714 = vmatpush1.bf16.msra.mxu0 0
    %715 = vmatprep.subr.bf16.mxu0 0
    %716 = vmatpush1.bf16.msra.mxu0 0
    %717 = vmatprep.subr.bf16.mxu0 0
    %718 = vmatpush1.bf16.msra.mxu0 0
    %719 = vmatprep.subr.bf16.mxu0 0
    %720 = vmatpush1.bf16.msra.mxu0 0
    %721 = vmatprep.subr.bf16.mxu0 0
    %722 = vmatpush1.bf16.msra.mxu0 0
    %723 = vmatprep.subr.bf16.mxu0 0
    %724 = vmatpush1.bf16.msra.mxu0 0
    %725 = vmatprep.subr.bf16.mxu0 0
    %726 = vmatpush1.bf16.msra.mxu0 0
    %727 = vmatprep.mubr.f32.mxu0 0.0
    %728 = vmatmul.mubr.f32.gmra.mrb[0].mxu0 %v589
    %v729 = vpop.f32.mrb[0].mxu0
    %v730 = vadd.f32 0.0, %v729
    %v731 = vpop.f32.mrb[0].mxu0
    %732 = vdwg.mxu0
    %v733 = vmul.f32 %v692, 0.00591716
    %v734 = vmul.f32 %v730, 0.00591716
    %v735 = vmul.f32 %v733, %v733
    %v736 = vsub.f32 %v734, %v735
    %v737 = vmax.f32 %v736, 0.0
    %v738 = vadd.f32 %v737, 1e-05
    %v739 = vrsqrt.pop %v738
    %v740 = vld [vmem:[%s4] sm:$0xf]
    %v741 = vld [vmem:[%s6] sm:$0xf]
    %v742 = vld [vmem:[%s6 + $0x4] sm:$0xf]
    %v743 = vld [vmem:[%s6 + $0x8] sm:$0xf]
    %v744 = vld [vmem:[%s6 + $0xc] sm:$0x7]
    %vm745 = vcmask 64512
    %v747 = vsel %vm745, %v733, 0
    %vm749 = vcmask 1043456
    %v751 = vsel %vm749, %v740, 0
    %753 = vmatprep.subr.bf16.mxu0 0
    %754 = vmatpush1.bf16.msra.mxu0 %v751
    %755 = vmatprep.subr.bf16.mxu0 0
    %756 = vmatpush1.bf16.msra.mxu0 0
    %757 = vmatprep.subr.bf16.mxu0 0
    %758 = vmatpush1.bf16.msra.mxu0 0
    %759 = vmatprep.subr.bf16.mxu0 0
    %760 = vmatpush1.bf16.msra.mxu0 0
    %761 = vmatprep.subr.bf16.mxu0 0
    %762 = vmatpush1.bf16.msra.mxu0 0
    %763 = vmatprep.subr.bf16.mxu0 0
    %764 = vmatpush1.bf16.msra.mxu0 0
    %765 = vmatprep.subr.bf16.mxu0 0
    %766 = vmatpush1.bf16.msra.mxu0 0
    %767 = vmatprep.subr.bf16.mxu0 0
    %768 = vmatpush1.bf16.msra.mxu0 0
    %769 = vmatprep.subr.bf16.mxu0 0
    %770 = vmatpush1.bf16.msra.mxu0 0
    %771 = vmatprep.subr.bf16.mxu0 0
    %772 = vmatpush1.bf16.msra.mxu0 0
    %773 = vmatprep.subr.bf16.mxu0 0
    %774 = vmatpush1.bf16.msra.mxu0 0
    %775 = vmatprep.subr.bf16.mxu0 0
    %776 = vmatpush1.bf16.msra.mxu0 0
    %777 = vmatprep.subr.bf16.mxu0 0
    %778 = vmatpush1.bf16.msra.mxu0 0
    %779 = vmatprep.subr.bf16.mxu0 0
    %780 = vmatpush1.bf16.msra.mxu0 0
    %781 = vmatprep.subr.bf16.mxu0 0
    %782 = vmatpush1.bf16.msra.mxu0 0
    %783 = vmatprep.subr.bf16.mxu0 0
    %784 = vmatpush1.bf16.msra.mxu0 0
    %785 = vmatprep.mubr.f32.mxu0 0.0
    %786 = vmatmul.mubr.f32.gmra.mrb[0].mxu0 %v747
    %v787 = vpop.f32.mrb[0].mxu0
    %v788 = vadd.f32 0.0, %v787
    %v789 = vpop.f32.mrb[0].mxu0
    %790 = vdwg.mxu0
    %v795 = vunpack.c.l.b16 %v741
    %v796 = vunpack.c.l.b16 %v742
    %v797 = vunpack.c.l.b16 %v743
    %v798 = vunpack.c.l.b16 %v744
    %v799 = vpack.c.b16 %v796, %v795
    %v800 = vpack.c.b16 %v798, %v797
    %vm801 = vcmask 15360
    %v803 = vsel %vm801, %v799, 0
    %v806 = vsel %vm801, %v800, 0
    %vm808 = vcmask 1041408
    %v810 = vsel %vm808, %v788, 0
    %812 = vmatprep.subr.mxu0 0.0
    %813 = vmatpush1.msra.mxu0 %v810
    %814 = vmatprep.subr.mxu0 0.0
    %815 = vmatpush1.msra.mxu0 0.0
    %816 = vmatprep.subr.mxu0 0.0
    %817 = vmatpush1.msra.mxu0 0.0
    %818 = vmatprep.subr.mxu0 0.0
    %819 = vmatpush1.msra.mxu0 0.0
    %820 = vmatprep.subr.mxu0 0.0
    %821 = vmatpush1.msra.mxu0 0.0
    %822 = vmatprep.subr.mxu0 0.0
    %823 = vmatpush1.msra.mxu0 0.0
    %824 = vmatprep.subr.mxu0 0.0
    %825 = vmatpush1.msra.mxu0 0.0
    %826 = vmatprep.subr.mxu0 0.0
    %827 = vmatpush1.msra.mxu0 0.0
    %828 = vmatprep.subr.mxu0 0.0
    %829 = vmatpush1.msra.mxu0 0.0
    %830 = vmatprep.subr.mxu0 0.0
    %831 = vmatpush1.msra.mxu0 0.0
    %832 = vmatprep.subr.mxu0 0.0
    %833 = vmatpush1.msra.mxu0 0.0
    %834 = vmatprep.subr.mxu0 0.0
    %835 = vmatpush1.msra.mxu0 0.0
    %836 = vmatprep.subr.mxu0 0.0
    %837 = vmatpush1.msra.mxu0 0.0
    %838 = vmatprep.subr.mxu0 0.0
    %839 = vmatpush1.msra.mxu0 0.0
    %840 = vmatprep.subr.mxu0 0.0
    %841 = vmatpush1.msra.mxu0 0.0
    %842 = vmatprep.subr.mxu0 0.0
    %843 = vmatpush1.msra.mxu0 0.0
    %844 = vmatprep.subr.mxu0 0.0
    %845 = vmatpush1.msra.mxu0 0.0
    %846 = vmatprep.subr.mxu0 0.0
    %847 = vmatpush1.msra.mxu0 0.0
    %848 = vmatprep.subr.mxu0 0.0
    %849 = vmatpush1.msra.mxu0 0.0
    %850 = vmatprep.subr.mxu0 0.0
    %851 = vmatpush1.msra.mxu0 0.0
    %852 = vmatprep.subr.mxu0 0.0
    %853 = vmatpush1.msra.mxu0 0.0
    %854 = vmatprep.subr.mxu0 0.0
    %855 = vmatpush1.msra.mxu0 0.0
    %856 = vmatprep.subr.mxu0 0.0
    %857 = vmatpush1.msra.mxu0 0.0
    %858 = vmatprep.subr.mxu0 0.0
    %859 = vmatpush1.msra.mxu0 0.0
    %860 = vmatprep.subr.mxu0 0.0
    %861 = vmatpush1.msra.mxu0 0.0
    %862 = vmatprep.subr.mxu0 0.0
    %863 = vmatpush1.msra.mxu0 0.0
    %864 = vmatprep.subr.mxu0 0.0
    %865 = vmatpush1.msra.mxu0 0.0
    %866 = vmatprep.subr.mxu0 0.0
    %867 = vmatpush1.msra.mxu0 0.0
    %868 = vmatprep.subr.mxu0 0.0
    %869 = vmatpush1.msra.mxu0 0.0
    %870 = vmatprep.subr.mxu0 0.0
    %871 = vmatpush1.msra.mxu0 0.0
    %872 = vmatprep.subr.mxu0 0.0
    %873 = vmatpush1.msra.mxu0 0.0
    %874 = vmatprep.subr.mxu0 0.0
    %875 = vmatpush1.msra.mxu0 0.0
    %876 = vmatprep.mubr.bf16.mxu0 0
    %877 = vmatmul.mubr.bf16.gmra.mrb[0].mxu0 %v803
    %v878 = vpop.f32.mrb[0].mxu0
    %v879 = vadd.f32 0.0, %v878
    %v880 = vpop.f32.mrb[0].mxu0
    %v881 = vpop.f32.mrb[0].mxu0
    %v882 = vadd.f32 0.0, %v881
    %v883 = vpop.f32.mrb[0].mxu0
    %884 = vmatprep.mubr.bf16.mxu0 0
    %885 = vmatmul.mubr.bf16.gmra.mrb[0].mxu0 %v806
    %v886 = vpop.f32.mrb[0].mxu0
    %v887 = vadd.f32 0.0, %v886
    %v888 = vpop.f32.mrb[0].mxu0
    %v889 = vpop.f32.mrb[0].mxu0
    %v890 = vadd.f32 0.0, %v889
    %v891 = vpop.f32.mrb[0].mxu0
    %892 = vdwg.mxu0
    %v894 = vsel %vm745, %v739, 0
    %896 = vmatprep.subr.bf16.mxu0 0
    %897 = vmatpush1.bf16.msra.mxu0 %v751
    %898 = vmatprep.subr.bf16.mxu0 0
    %899 = vmatpush1.bf16.msra.mxu0 0
    %900 = vmatprep.subr.bf16.mxu0 0
    %901 = vmatpush1.bf16.msra.mxu0 0
    %902 = vmatprep.subr.bf16.mxu0 0
    %903 = vmatpush1.bf16.msra.mxu0 0
    %904 = vmatprep.subr.bf16.mxu0 0
    %905 = vmatpush1.bf16.msra.mxu0 0
    %906 = vmatprep.subr.bf16.mxu0 0
    %907 = vmatpush1.bf16.msra.mxu0 0
    %908 = vmatprep.subr.bf16.mxu0 0
    %909 = vmatpush1.bf16.msra.mxu0 0
    %910 = vmatprep.subr.bf16.mxu0 0
    %911 = vmatpush1.bf16.msra.mxu0 0
    %912 = vmatprep.subr.bf16.mxu0 0
    %913 = vmatpush1.bf16.msra.mxu0 0
    %914 = vmatprep.subr.bf16.mxu0 0
    %915 = vmatpush1.bf16.msra.mxu0 0
    %916 = vmatprep.subr.bf16.mxu0 0
    %917 = vmatpush1.bf16.msra.mxu0 0
    %918 = vmatprep.subr.bf16.mxu0 0
    %919 = vmatpush1.bf16.msra.mxu0 0
    %920 = vmatprep.subr.bf16.mxu0 0
    %921 = vmatpush1.bf16.msra.mxu0 0
    %922 = vmatprep.subr.bf16.mxu0 0
    %923 = vmatpush1.bf16.msra.mxu0 0
    %924 = vmatprep.subr.bf16.mxu0 0
    %925 = vmatpush1.bf16.msra.mxu0 0
    %926 = vmatprep.subr.bf16.mxu0 0
    %927 = vmatpush1.bf16.msra.mxu0 0
    %928 = vmatprep.mubr.f32.mxu0 0.0
    %929 = vmatmul.mubr.f32.gmra.mrb[0].mxu0 %v894
    %v930 = vpop.f32.mrb[0].mxu0
    %v931 = vadd.f32 0.0, %v930
    %v932 = vpop.f32.mrb[0].mxu0
    %933 = vdwg.mxu0
    %v935 = vsel %vm808, %v931, 0
    %937 = vmatprep.subr.mxu0 0.0
    %938 = vmatpush1.msra.mxu0 %v935
    %939 = vmatprep.subr.mxu0 0.0
    %940 = vmatpush1.msra.mxu0 0.0
    %941 = vmatprep.subr.mxu0 0.0
    %942 = vmatpush1.msra.mxu0 0.0
    %943 = vmatprep.subr.mxu0 0.0
    %944 = vmatpush1.msra.mxu0 0.0
    %945 = vmatprep.subr.mxu0 0.0
    %946 = vmatpush1.msra.mxu0 0.0
    %947 = vmatprep.subr.mxu0 0.0
    %948 = vmatpush1.msra.mxu0 0.0
    %949 = vmatprep.subr.mxu0 0.0
    %950 = vmatpush1.msra.mxu0 0.0
    %951 = vmatprep.subr.mxu0 0.0
    %952 = vmatpush1.msra.mxu0 0.0
    %953 = vmatprep.subr.mxu0 0.0
    %954 = vmatpush1.msra.mxu0 0.0
    %955 = vmatprep.subr.mxu0 0.0
    %956 = vmatpush1.msra.mxu0 0.0
    %957 = vmatprep.subr.mxu0 0.0
    %958 = vmatpush1.msra.mxu0 0.0
    %959 = vmatprep.subr.mxu0 0.0
    %960 = vmatpush1.msra.mxu0 0.0
    %961 = vmatprep.subr.mxu0 0.0
    %962 = vmatpush1.msra.mxu0 0.0
    %963 = vmatprep.subr.mxu0 0.0
    %964 = vmatpush1.msra.mxu0 0.0
    %965 = vmatprep.subr.mxu0 0.0
    %966 = vmatpush1.msra.mxu0 0.0
    %967 = vmatprep.subr.mxu0 0.0
    %968 = vmatpush1.msra.mxu0 0.0
    %969 = vmatprep.subr.mxu0 0.0
    %970 = vmatpush1.msra.mxu0 0.0
    %971 = vmatprep.subr.mxu0 0.0
    %972 = vmatpush1.msra.mxu0 0.0
    %973 = vmatprep.subr.mxu0 0.0
    %974 = vmatpush1.msra.mxu0 0.0
    %975 = vmatprep.subr.mxu0 0.0
    %976 = vmatpush1.msra.mxu0 0.0
    %977 = vmatprep.subr.mxu0 0.0
    %978 = vmatpush1.msra.mxu0 0.0
    %979 = vmatprep.subr.mxu0 0.0
    %980 = vmatpush1.msra.mxu0 0.0
    %981 = vmatprep.subr.mxu0 0.0
    %982 = vmatpush1.msra.mxu0 0.0
    %983 = vmatprep.subr.mxu0 0.0
    %984 = vmatpush1.msra.mxu0 0.0
    %985 = vmatprep.subr.mxu0 0.0
    %986 = vmatpush1.msra.mxu0 0.0
    %987 = vmatprep.subr.mxu0 0.0
    %988 = vmatpush1.msra.mxu0 0.0
    %989 = vmatprep.subr.mxu0 0.0
    %990 = vmatpush1.msra.mxu0 0.0
    %991 = vmatprep.subr.mxu0 0.0
    %992 = vmatpush1.msra.mxu0 0.0
    %993 = vmatprep.subr.mxu0 0.0
    %994 = vmatpush1.msra.mxu0 0.0
    %995 = vmatprep.subr.mxu0 0.0
    %996 = vmatpush1.msra.mxu0 0.0
    %997 = vmatprep.subr.mxu0 0.0
    %998 = vmatpush1.msra.mxu0 0.0
    %999 = vmatprep.subr.mxu0 0.0
    %1000 = vmatpush1.msra.mxu0 0.0
    %1001 = vmatprep.mubr.bf16.mxu0 0
    %1002 = vmatmul.mubr.bf16.gmra.mrb[0].mxu0 %v803
    %v1003 = vpop.f32.mrb[0].mxu0
    %v1004 = vadd.f32 0.0, %v1003
    %v1005 = vpop.f32.mrb[0].mxu0
    %v1006 = vpop.f32.mrb[0].mxu0
    %v1007 = vadd.f32 0.0, %v1006
    %v1008 = vpop.f32.mrb[0].mxu0
    %1009 = vmatprep.mubr.bf16.mxu0 0
    %1010 = vmatmul.mubr.bf16.gmra.mrb[0].mxu0 %v806
    %v1011 = vpop.f32.mrb[0].mxu0
    %v1012 = vadd.f32 0.0, %v1011
    %v1013 = vpop.f32.mrb[0].mxu0
    %v1014 = vpop.f32.mrb[0].mxu0
    %v1015 = vadd.f32 0.0, %v1014
    %v1016 = vpop.f32.mrb[0].mxu0
    %1017 = vdwg.mxu0
    %v1018 = vsub.f32 %v500, %v879
    %v1019 = vsub.f32 %v501, %v882
    %v1020 = vsub.f32 %v502, %v887
    %v1021 = vsub.f32 %v503, %v890
    %v1022 = vld [vmem:[%s2 + $0x1] sm:$0x1]
    %v1023 = vlaneseq
    %v1024 = vshrl.u32 %v1023, 7
    %v1025 = vsub.s32 0, %v1024
    %v1026 = vrot.slane %v1022, %v1025
    %v1027 = vmul.f32 %v1004, %v1026
    %v1028 = vmul.f32 %v1007, %v1026
    %v1029 = vmul.f32 %v1012, %v1026
    %v1030 = vmul.f32 %v1015, %v1026
    %v1031 = vmul.f32 %v1018, %v1027
    %v1032 = vmul.f32 %v1019, %v1028
    %v1033 = vmul.f32 %v1020, %v1029
    %v1034 = vmul.f32 %v1021, %v1030
    %v1035 = vld [vmem:[%s2 + $0x2] sm:$0x1]
    %v1036 = vlaneseq
    %v1037 = vshrl.u32 %v1036, 7
    %v1038 = vsub.s32 0, %v1037
    %v1039 = vrot.slane %v1035, %v1038
    %v1040 = vadd.f32 %v1031, %v1039
    %v1041 = vadd.f32 %v1032, %v1039
    %v1042 = vadd.f32 %v1033, %v1039
    %v1043 = vadd.f32 %v1034, %v1039
    %vm1044 = vcmp.ge.f32.partialorder %v1040, 0.0
    %vm1045 = vcmp.ge.f32.partialorder %v1041, 0.0
    %vm1046 = vcmp.ge.f32.partialorder %v1042, 0.0
    %vm1047 = vcmp.ge.f32.partialorder %v1043, 0.0
    %v1048 = vmul.f32 %v1040, 0.2
    %v1049 = vmul.f32 %v1041, 0.2
    %v1050 = vmul.f32 %v1042, 0.2
    %v1051 = vmul.f32 %v1043, 0.2
    %v1052 = vsel %vm1044, %v1040, %v1048
    %v1053 = vsel %vm1045, %v1041, %v1049
    %v1054 = vsel %vm1046, %v1042, %v1050
    %v1055 = vsel %vm1047, %v1043, %v1051
    %v1056 = vld [vmem:[%s7] sm:$0xf]
    %v1057 = vld [vmem:[%s7 + $0x4] sm:$0x3]
    %v1060 = vunpack.c.l.b16 %v1056
    %v1061 = vunpack.c.l.b16 %v1057
    %v1062 = vpack.c.b16 %v1061, %v1060
    %v1064 = vsel %vm509, %v1062, 0
    %v1067 = vsel %vm513, %v1055, 0
    %1069 = vmatprep.subr.mxu0 0.0
    %1070 = vmatpush1.msra.mxu0 %v1052
    %1071 = vmatprep.subr.mxu0 0.0
    %1072 = vmatpush1.msra.mxu0 %v1053
    %1073 = vmatprep.subr.mxu0 0.0
    %1074 = vmatpush1.msra.mxu0 %v1054
    %1075 = vmatprep.subr.mxu0 0.0
    %1076 = vmatpush1.msra.mxu0 %v1067
    %1077 = vmatprep.subr.mxu0 0.0
    %1078 = vmatpush1.msra.mxu0 0.0
    %1079 = vmatprep.subr.mxu0 0.0
    %1080 = vmatpush1.msra.mxu0 0.0
    %1081 = vmatprep.subr.mxu0 0.0
    %1082 = vmatpush1.msra.mxu0 0.0
    %1083 = vmatprep.subr.mxu0 0.0
    %1084 = vmatpush1.msra.mxu0 0.0
    %1085 = vmatprep.subr.mxu0 0.0
    %1086 = vmatpush1.msra.mxu0 0.0
    %1087 = vmatprep.subr.mxu0 0.0
    %1088 = vmatpush1.msra.mxu0 0.0
    %1089 = vmatprep.subr.mxu0 0.0
    %1090 = vmatpush1.msra.mxu0 0.0
    %1091 = vmatprep.subr.mxu0 0.0
    %1092 = vmatpush1.msra.mxu0 0.0
    %1093 = vmatprep.subr.mxu0 0.0
    %1094 = vmatpush1.msra.mxu0 0.0
    %1095 = vmatprep.subr.mxu0 0.0
    %1096 = vmatpush1.msra.mxu0 0.0
    %1097 = vmatprep.subr.mxu0 0.0
    %1098 = vmatpush1.msra.mxu0 0.0
    %1099 = vmatprep.subr.mxu0 0.0
    %1100 = vmatpush1.msra.mxu0 0.0
    %1101 = vmatprep.subr.mxu0 0.0
    %1102 = vmatpush1.msra.mxu0 0.0
    %1103 = vmatprep.subr.mxu0 0.0
    %1104 = vmatpush1.msra.mxu0 0.0
    %1105 = vmatprep.subr.mxu0 0.0
    %1106 = vmatpush1.msra.mxu0 0.0
    %1107 = vmatprep.subr.mxu0 0.0
    %1108 = vmatpush1.msra.mxu0 0.0
    %1109 = vmatprep.subr.mxu0 0.0
    %1110 = vmatpush1.msra.mxu0 0.0
    %1111 = vmatprep.subr.mxu0 0.0
    %1112 = vmatpush1.msra.mxu0 0.0
    %1113 = vmatprep.subr.mxu0 0.0
    %1114 = vmatpush1.msra.mxu0 0.0
    %1115 = vmatprep.subr.mxu0 0.0
    %1116 = vmatpush1.msra.mxu0 0.0
    %1117 = vmatprep.subr.mxu0 0.0
    %1118 = vmatpush1.msra.mxu0 0.0
    %1119 = vmatprep.subr.mxu0 0.0
    %1120 = vmatpush1.msra.mxu0 0.0
    %1121 = vmatprep.subr.mxu0 0.0
    %1122 = vmatpush1.msra.mxu0 0.0
    %1123 = vmatprep.subr.mxu0 0.0
    %1124 = vmatpush1.msra.mxu0 0.0
    %1125 = vmatprep.subr.mxu0 0.0
    %1126 = vmatpush1.msra.mxu0 0.0
    %1127 = vmatprep.subr.mxu0 0.0
    %1128 = vmatpush1.msra.mxu0 0.0
    %1129 = vmatprep.subr.mxu0 0.0
    %1130 = vmatpush1.msra.mxu0 0.0
    %1131 = vmatprep.subr.mxu0 0.0
    %1132 = vmatpush1.msra.mxu0 0.0
    %1133 = vmatprep.mubr.bf16.mxu0 0
    %1134 = vmatmul.mubr.bf16.gmra.mrb[0].mxu0 %v1064
    %v1135 = vpop.f32.mrb[0].mxu0
    %v1136 = vadd.f32 0.0, %v1135
    %v1137 = vpop.f32.mrb[0].mxu0
    %v1138 = vpop.f32.mrb[0].mxu0
    %v1139 = vadd.f32 0.0, %v1138
    %v1140 = vpop.f32.mrb[0].mxu0
    %1141 = vdwg.mxu0
    %v1142 = vld [vmem:[%s8] sm:$0xf]
    %v1143 = vld [vmem:[%s8 + $0x4] sm:$0xf]
    %v1144 = vld [vmem:[%s8 + $0x8] sm:$0xf]
    %v1145 = vld [vmem:[%s8 + $0xc] sm:$0xf]
    %v1146 = vld [vmem:[%s8 + $0x10] sm:$0xf]
    %v1147 = vld [vmem:[%s8 + $0x14] sm:$0xf]
    %v1148 = vld [vmem:[%s8 + $0x18] sm:$0xf]
    %v1149 = vld [vmem:[%s8 + $0x1c] sm:$0xf]
    %v1150 = vld [vmem:[%s8 + $0x20] sm:$0xf]
    %v1151 = vld [vmem:[%s8 + $0x24] sm:$0xf]
    %v1152 = vld [vmem:[%s8 + $0x28] sm:$0xf]
    %v1153 = vld [vmem:[%s8 + $0x2c] sm:$0xf]
    %v1154 = vld [vmem:[%s8 + $0x30] sm:$0xf]
    %v1155 = vld [vmem:[%s8 + $0x34] sm:$0xf]
    %v1156 = vld [vmem:[%s8 + $0x38] sm:$0xf]
    %v1157 = vld [vmem:[%s8 + $0x3c] sm:$0xf]
    %v1174 = vunpack.c.l.b16 %v1142
    %v1175 = vunpack.c.l.b16 %v1143
    %v1176 = vunpack.c.l.b16 %v1144
    %v1177 = vunpack.c.l.b16 %v1145
    %v1178 = vunpack.c.l.b16 %v1146
    %v1179 = vunpack.c.l.b16 %v1147
    %v1180 = vunpack.c.l.b16 %v1148
    %v1181 = vunpack.c.l.b16 %v1149
    %v1182 = vunpack.c.l.b16 %v1150
    %v1183 = vunpack.c.l.b16 %v1151
    %v1184 = vunpack.c.l.b16 %v1152
    %v1185 = vunpack.c.l.b16 %v1153
    %v1186 = vunpack.c.l.b16 %v1154
    %v1187 = vunpack.c.l.b16 %v1155
    %v1188 = vunpack.c.l.b16 %v1156
    %v1189 = vunpack.c.l.b16 %v1157
    %v1190 = vpack.c.b16 %v1175, %v1174
    %v1191 = vpack.c.b16 %v1177, %v1176
    %v1192 = vpack.c.b16 %v1179, %v1178
    %v1193 = vpack.c.b16 %v1181, %v1180
    %v1194 = vpack.c.b16 %v1183, %v1182
    %v1195 = vpack.c.b16 %v1185, %v1184
    %v1196 = vpack.c.b16 %v1187, %v1186
    %v1197 = vpack.c.b16 %v1189, %v1188
    %1206 = vmatprep.subr.bf16.mxu0 0
    %1207 = vmatpush1.bf16.msra.mxu0 %v1190
    %1208 = vmatprep.subr.bf16.mxu0 0
    %1209 = vmatpush1.bf16.msra.mxu0 %v1191
    %1210 = vmatprep.subr.bf16.mxu0 0
    %1211 = vmatpush1.bf16.msra.mxu0 %v1192
    %1212 = vmatprep.subr.bf16.mxu0 0
    %1213 = vmatpush1.bf16.msra.mxu0 %v1193
    %1214 = vmatprep.subr.bf16.mxu0 0
    %1215 = vmatpush1.bf16.msra.mxu0 %v1194
    %1216 = vmatprep.subr.bf16.mxu0 0
    %1217 = vmatpush1.bf16.msra.mxu0 %v1195
    %1218 = vmatprep.subr.bf16.mxu0 0
    %1219 = vmatpush1.bf16.msra.mxu0 %v1196
    %1220 = vmatprep.subr.bf16.mxu0 0
    %1221 = vmatpush1.bf16.msra.mxu0 %v1197
    %1222 = vmatprep.subr.bf16.mxu0 0
    %1223 = vmatpush1.bf16.msra.mxu0 0
    %1224 = vmatprep.subr.bf16.mxu0 0
    %1225 = vmatpush1.bf16.msra.mxu0 0
    %1226 = vmatprep.subr.bf16.mxu0 0
    %1227 = vmatpush1.bf16.msra.mxu0 0
    %1228 = vmatprep.subr.bf16.mxu0 0
    %1229 = vmatpush1.bf16.msra.mxu0 0
    %1230 = vmatprep.subr.bf16.mxu0 0
    %1231 = vmatpush1.bf16.msra.mxu0 0
    %1232 = vmatprep.subr.bf16.mxu0 0
    %1233 = vmatpush1.bf16.msra.mxu0 0
    %1234 = vmatprep.subr.bf16.mxu0 0
    %1235 = vmatpush1.bf16.msra.mxu0 0
    %1236 = vmatprep.subr.bf16.mxu0 0
    %1237 = vmatpush1.bf16.msra.mxu0 0
    %1238 = vmatprep.mubr.f32.mxu0 0.0
    %1239 = vmatmul.mubr.f32.gmra.mrb[0].mxu0 %v1136
    %v1240 = vpop.f32.mrb[0].mxu0
    %v1241 = vadd.f32 0.0, %v1240
    %v1242 = vpop.f32.mrb[0].mxu0
    %1243 = vmatprep.mubr.f32.mxu0 0.0
    %1244 = vmatmul.mubr.f32.gmra.mrb[0].mxu0 %v1139
    %v1245 = vpop.f32.mrb[0].mxu0
    %v1246 = vadd.f32 0.0, %v1245
    %v1247 = vpop.f32.mrb[0].mxu0
    %1248 = vdwg.mxu0
    %v1249 = vmul.f32 %v1241, 0.25
    %v1250 = vmul.f32 %v1246, 0.25
    %1251 = vst [vmem:[%s9] sm:$0xff] %v1249
    %1252 = vst [vmem:[%s9 + $0x8] sm:$0xf] %v1250
    // Predicated region
    $region42: #{tpu_custom_call.1} parent=1 // pred_check
      _
    $region43: #{tpu_custom_call.1} parent=1 // pred_check_branch
      %1254 = sbr.rel (0) target = $region45
    $region44: #{tpu_custom_call.1} parent=1 // pred_region
      _
    $region45: #{tpu_custom_call.1} parent=1 // pred_fallthru
      _
    // Predicated region
    $region46: #{tpu_custom_call.1} parent=1 // pred_check
      _
    $region47: #{tpu_custom_call.1} parent=1 // pred_check_branch
      %1256 = sbr.rel (0) target = $region49
    $region48: #{tpu_custom_call.1} parent=1 // pred_region
      _
    $region49: #{tpu_custom_call.1} parent=1 // pred_fallthru
      _
    %1257 = vsyncpa [#allocation3], 1

</llo_original>
